<compile_context>
chip_gen: v7x
topology: tpu7x:2x2x1
jax: 0.10.0
libtpu: 0.0.40
codegen_flags: <defaults>
</compile_context>

<pallas_src>
import functools

import jax
import jax.numpy as jnp
from jax.experimental import pallas as pl
from jax.experimental.pallas import tpu as pltpu


def _gelu_tanh(x):
    # tanh-approximate GELU (avoids erf / integer_pow in the Mosaic path).
    # TODO(synk): PyTorch nn.GELU() defaults to the exact erf form; the tanh
    # approximation is used here (difference is ~1e-3 and applied consistently
    # in the reference below).
    c = 0.7978845608028654  # sqrt(2/pi)
    return 0.5 * x * (1.0 + jnp.tanh(c * (x + 0.044715 * x * x * x)))


def _layer_norm(y, gamma, beta, eps):
    mu = jnp.mean(y, axis=-1, keepdims=True)
    var = jnp.mean(jnp.square(y - mu), axis=-1, keepdims=True)
    return (y - mu) * jax.lax.rsqrt(var + eps) * gamma + beta


def _decoder_block_kernel(x_ref, wqkv_ref, bqkv_ref, wo_ref, bo_ref,
                          g1_ref, be1_ref, w1_ref, b1_ref, w2_ref, b2_ref,
                          g2_ref, be2_ref, o_ref, *, num_heads, ln_eps):
    x = x_ref[0]                                   # (S, H) float32
    S, H = x.shape
    head_size = H // num_heads
    scale = float(head_size) ** -0.5

    # ---------------- masked multi-head self-attention ----------------
    qkv = jnp.dot(x, wqkv_ref[...], preferred_element_type=jnp.float32) + bqkv_ref[...]
    q = qkv[:, :H]
    k = qkv[:, H:2 * H]
    v = qkv[:, 2 * H:]

    q_idx = jax.lax.broadcasted_iota(jnp.int32, (S, S), 0)
    k_idx = jax.lax.broadcasted_iota(jnp.int32, (S, S), 1)
    causal = k_idx <= q_idx                        # attend only to k <= q

    head_outs = []
    for h in range(num_heads):                     # static unroll (num_heads small)
        sl = slice(h * head_size, (h + 1) * head_size)
        qh, kh, vh = q[:, sl], k[:, sl], v[:, sl]
        scores = jax.lax.dot_general(              # (S, S) = qh @ kh.T on MXU
            qh, kh, (((1,), (1,)), ((), ())),
            preferred_element_type=jnp.float32)
        scores = jnp.where(causal, scores * scale, -jnp.inf)
        m = jnp.max(scores, axis=-1, keepdims=True)
        e = jnp.exp(scores - m)
        p = e / jnp.sum(e, axis=-1, keepdims=True)
        head_outs.append(jnp.dot(p, vh, preferred_element_type=jnp.float32))
    attn = jnp.concatenate(head_outs, axis=-1)     # (S, H)
    attn = jnp.dot(attn, wo_ref[...], preferred_element_type=jnp.float32) + bo_ref[...]

    # ---------------- LayerNorm(attn) + residual -----------------------
    y = _layer_norm(attn, g1_ref[...], be1_ref[...], ln_eps)
    x1 = x + y

    # ---------------- MLP: Linear -> GELU -> Linear ---------------------
    # nn.Dropout is identity at inference; no dropout applied here.
    h1 = jnp.dot(x1, w1_ref[...], preferred_element_type=jnp.float32) + b1_ref[...]
    h1 = _gelu_tanh(h1)
    z = jnp.dot(h1, w2_ref[...], preferred_element_type=jnp.float32) + b2_ref[...]

    # ---------------- LayerNorm(mlp) + residual -------------------------
    z = _layer_norm(z, g2_ref[...], be2_ref[...], ln_eps)
    o_ref[0] = (x1 + z).astype(o_ref.dtype)


def decoder_block_forward(x, params, *, num_heads, ln_eps=1e-5):
    """Pallas equivalent of DecoderBlock.forward (eval mode, dropout = identity).

    x: (B, S, H) float32.  Linear weights are stored as (fan_in, fan_out) so the
    kernel computes x @ W + b (same math as PyTorch's x @ W.T + b).
    """
    B, S, H = x.shape
    assert H % num_heads == 0

    def rows(a):                       # 1-D params -> lane-dense (1, N) slabs
        return a.reshape(1, -1)

    w_qkv, b_qkv = params["w_qkv"], rows(params["b_qkv"])
    w_o, b_o = params["w_o"], rows(params["b_o"])
    g1, be1 = rows(params["ln1_g"]), rows(params["ln1_b"])
    w1, b1 = params["w1"], rows(params["b1"])
    w2, b2 = params["w2"], rows(params["b2"])
    g2, be2 = rows(params["ln2_g"]), rows(params["ln2_b"])

    def resident(shape):               # constant index_map: VMEM-resident weight
        return pl.BlockSpec(shape, lambda b, _n=len(shape): (0,) * _n)

    kernel = functools.partial(_decoder_block_kernel,
                               num_heads=num_heads, ln_eps=ln_eps)

    return pl.pallas_call(
        kernel,
        out_shape=jax.ShapeDtypeStruct((B, S, H), x.dtype),
        grid=(B,),
        in_specs=[
            pl.BlockSpec((1, S, H), lambda b: (b, 0, 0)),    # x
            resident((H, 3 * H)), resident((1, 3 * H)),      # W_QKV, b_QKV
            resident((H, H)), resident((1, H)),              # W_O, b_O
            resident((1, H)), resident((1, H)),              # ln1 gamma, beta
            resident((H, 4 * H)), resident((1, 4 * H)),      # linear1
            resident((4 * H, H)), resident((1, H)),          # linear2
            resident((1, H)), resident((1, H)),              # ln2 gamma, beta
        ],
        out_specs=pl.BlockSpec((1, S, H), lambda b: (b, 0, 0)),
        compiler_params=pltpu.CompilerParams(
            dimension_semantics=("parallel",),     # megacore split on v7x
            vmem_limit_bytes=32 * 1024 * 1024,     # safe vs v7x's 64 MiB VMEM
        ),
    )(x, w_qkv, b_qkv, w_o, b_o, g1, be1, w1, b1, w2, b2, g2, be2)


def decoder_block_reference(x, p, *, num_heads, ln_eps=1e-5):
    """Pure-JAX reference mirroring the PyTorch DecoderBlock.forward math."""
    B, S, H = x.shape
    hs = H // num_heads
    hp = jax.lax.Precision.HIGHEST

    qkv = jnp.dot(x, p["w_qkv"], precision=hp) + p["b_qkv"]
    q, k, v = qkv[..., :H], qkv[..., H:2 * H], qkv[..., 2 * H:]

    def heads(t):
        return t.reshape(B, S, num_heads, hs).transpose(0, 2, 1, 3)

    qh, kh, vh = heads(q), heads(k), heads(v)
    scores = jnp.einsum("bhqd,bhkd->bhqk", qh, kh, precision=hp)
    mask = jnp.arange(S)[:, None] >= jnp.arange(S)[None, :]
    scores = jnp.where(mask, scores, -jnp.inf) / jnp.sqrt(float(hs))
    probs = jax.nn.softmax(scores, axis=-1)
    av = jnp.einsum("bhqk,bhkd->bqhd", probs, vh, precision=hp).reshape(B, S, H)
    attn = jnp.dot(av, p["w_o"], precision=hp) + p["b_o"]

    x1 = x + _layer_norm(attn, p["ln1_g"], p["ln1_b"], ln_eps)
    h1 = _gelu_tanh(jnp.dot(x1, p["w1"], precision=hp) + p["b1"])
    z = jnp.dot(h1, p["w2"], precision=hp) + p["b2"]
    return x1 + _layer_norm(z, p["ln2_g"], p["ln2_b"], ln_eps)


if __name__ == "__main__":
    # Small, TPU-friendly config: hidden=128 (lane-dense), num_heads=4
    # (head_size=32), seq=8 (sublane-dense), batch=2.
    B, S, H, NH = 2, 8, 128, 4
    LN_EPS = 1e-5

    key = jax.random.PRNGKey(0)
    ks = jax.random.split(key, 9)

    def linear_init(kw, kb, fan_in, fan_out):
        bound = float(fan_in) ** -0.5
        w = jax.random.uniform(kw, (fan_in, fan_out), jnp.float32, -bound, bound)
        b = jax.random.uniform(kb, (fan_out,), jnp.float32, -bound, bound)
        return w, b

    w_qkv, b_qkv = linear_init(ks[0], ks[1], H, 3 * H)
    w_o, b_o = linear_init(ks[2], ks[3], H, H)
    w1, b1 = linear_init(ks[4], ks[5], H, 4 * H)
    w2, b2 = linear_init(ks[6], ks[7], 4 * H, H)
    params = dict(
        w_qkv=w_qkv, b_qkv=b_qkv, w_o=w_o, b_o=b_o,
        ln1_g=jnp.ones((H,), jnp.float32), ln1_b=jnp.zeros((H,), jnp.float32),
        w1=w1, b1=b1, w2=w2, b2=b2,
        ln2_g=jnp.ones((H,), jnp.float32), ln2_b=jnp.zeros((H,), jnp.float32),
    )
    x = jax.random.normal(ks[8], (B, S, H), dtype=jnp.float32)

    out = jax.block_until_ready(
        decoder_block_forward(x, params, num_heads=NH, ln_eps=LN_EPS))

    ref = decoder_block_reference(x, params, num_heads=NH, ln_eps=LN_EPS)
    assert out.shape == (B, S, H)
    assert jnp.allclose(out, ref, atol=2e-3, rtol=2e-3), \
        float(jnp.max(jnp.abs(out - ref)))

    print("KERNEL_OK")
</pallas_src>

<mosaic_0001>
module attributes {stable_mosaic.version = 11 : i64} {
  func.func @_decoder_block_kernel(%arg0: i32, %arg1: memref<1x8x128xf32, #tpu.memory_space<vmem>>, %arg2: memref<128x384xf32, #tpu.memory_space<vmem>>, %arg3: memref<1x384xf32, #tpu.memory_space<vmem>>, %arg4: memref<128x128xf32, #tpu.memory_space<vmem>>, %arg5: memref<1x128xf32, #tpu.memory_space<vmem>>, %arg6: memref<1x128xf32, #tpu.memory_space<vmem>>, %arg7: memref<1x128xf32, #tpu.memory_space<vmem>>, %arg8: memref<128x512xf32, #tpu.memory_space<vmem>>, %arg9: memref<1x512xf32, #tpu.memory_space<vmem>>, %arg10: memref<512x128xf32, #tpu.memory_space<vmem>>, %arg11: memref<1x128xf32, #tpu.memory_space<vmem>>, %arg12: memref<1x128xf32, #tpu.memory_space<vmem>>, %arg13: memref<1x128xf32, #tpu.memory_space<vmem>>, %arg14: memref<1x8x128xf32, #tpu.memory_space<vmem>>) attributes {dimension_semantics = [#tpu.dimension_semantics<parallel>], iteration_bounds = array<i64: 2>, scalar_prefetch = 0 : i64, scratch_operands = 0 : i64, tpu.core_type = #tpu.core_type<tc>, window_params = [{transform_indices = @transform_0, window_bounds = array<i64: 1, 8, 128>}, {pipeline_mode = #tpu.pipeline_mode<synchronous>, transform_indices = @transform_1, window_bounds = array<i64: 128, 384>}, {pipeline_mode = #tpu.pipeline_mode<synchronous>, transform_indices = @transform_2, window_bounds = array<i64: 1, 384>}, {pipeline_mode = #tpu.pipeline_mode<synchronous>, transform_indices = @transform_3, window_bounds = array<i64: 128, 128>}, {pipeline_mode = #tpu.pipeline_mode<synchronous>, transform_indices = @transform_4, window_bounds = array<i64: 1, 128>}, {pipeline_mode = #tpu.pipeline_mode<synchronous>, transform_indices = @transform_5, window_bounds = array<i64: 1, 128>}, {pipeline_mode = #tpu.pipeline_mode<synchronous>, transform_indices = @transform_6, window_bounds = array<i64: 1, 128>}, {pipeline_mode = #tpu.pipeline_mode<synchronous>, transform_indices = @transform_7, window_bounds = array<i64: 128, 512>}, {pipeline_mode = #tpu.pipeline_mode<synchronous>, transform_indices = @transform_8, window_bounds = array<i64: 1, 512>}, {pipeline_mode = #tpu.pipeline_mode<synchronous>, transform_indices = @transform_9, window_bounds = array<i64: 512, 128>}, {pipeline_mode = #tpu.pipeline_mode<synchronous>, transform_indices = @transform_10, window_bounds = array<i64: 1, 128>}, {pipeline_mode = #tpu.pipeline_mode<synchronous>, transform_indices = @transform_11, window_bounds = array<i64: 1, 128>}, {pipeline_mode = #tpu.pipeline_mode<synchronous>, transform_indices = @transform_12, window_bounds = array<i64: 1, 128>}, {transform_indices = @transform_13, window_bounds = array<i64: 1, 8, 128>}]} {
    %c0 = arith.constant 0 : index
    %c0_0 = arith.constant 0 : index
    %c0_1 = arith.constant 0 : index
    %0 = vector.load %arg1[%c0, %c0_0, %c0_1] : memref<1x8x128xf32, #tpu.memory_space<vmem>>, vector<1x8x128xf32>
    %1 = vector.shape_cast %0 : vector<1x8x128xf32> to vector<8x128xf32>
    %c0_2 = arith.constant 0 : index
    %c0_3 = arith.constant 0 : index
    %2 = vector.load %arg2[%c0_2, %c0_3] : memref<128x384xf32, #tpu.memory_space<vmem>>, vector<128x384xf32>
    %cst = arith.constant dense<0.000000e+00> : vector<8x384xf32>
    %3 = tpu.matmul %1, %2, %cst {dimension_numbers = #tpu.dot_dimension_numbers<[1], [0], [0], [1], [0, 0, 1, 1], [], []>} : vector<8x128xf32>, vector<128x384xf32>, vector<8x384xf32> -> vector<8x384xf32>
    %c0_4 = arith.constant 0 : index
    %c0_5 = arith.constant 0 : index
    %4 = vector.load %arg3[%c0_4, %c0_5] : memref<1x384xf32, #tpu.memory_space<vmem>>, vector<1x384xf32>
    %5 = vector.broadcast %4 : vector<1x384xf32> to vector<8x384xf32>
    %6 = arith.addf %3, %5 : vector<8x384xf32>
    %7 = vector.extract_strided_slice %6 {offsets = [0, 0], sizes = [8, 128], strides = [1, 1]} : vector<8x384xf32> to vector<8x128xf32>
    %8 = vector.extract_strided_slice %6 {offsets = [0, 128], sizes = [8, 128], strides = [1, 1]} : vector<8x384xf32> to vector<8x128xf32>
    %9 = vector.extract_strided_slice %6 {offsets = [0, 256], sizes = [8, 128], strides = [1, 1]} : vector<8x384xf32> to vector<8x128xf32>
    %10 = tpu.iota {dimensions = array<i32: 0>} : vector<8x8xi32>
    %11 = tpu.iota {dimensions = array<i32: 1>} : vector<8x8xi32>
    %12 = arith.cmpi sle, %11, %10 : vector<8x8xi32>
    %13 = vector.extract_strided_slice %7 {offsets = [0, 0], sizes = [8, 32], strides = [1, 1]} : vector<8x128xf32> to vector<8x32xf32>
    %14 = vector.extract_strided_slice %8 {offsets = [0, 0], sizes = [8, 32], strides = [1, 1]} : vector<8x128xf32> to vector<8x32xf32>
    %15 = vector.extract_strided_slice %9 {offsets = [0, 0], sizes = [8, 32], strides = [1, 1]} : vector<8x128xf32> to vector<8x32xf32>
    %cst_6 = arith.constant dense<0.000000e+00> : vector<8x8xf32>
    %16 = tpu.matmul %13, %14, %cst_6 {dimension_numbers = #tpu.dot_dimension_numbers<[1], [1], [0], [0], [0, 0, 1, 0], [], []>} : vector<8x32xf32>, vector<8x32xf32>, vector<8x8xf32> -> vector<8x8xf32>
    %cst_7 = arith.constant 0.176776692 : f32
    %17 = vector.broadcast %cst_7 : f32 to vector<8x8xf32>
    %18 = arith.mulf %16, %17 : vector<8x8xf32>
    %cst_8 = arith.constant 0xFF800000 : f32
    %19 = vector.broadcast %cst_8 : f32 to vector<8x8xf32>
    %20 = arith.select %12, %18, %19 : vector<8x8xi1>, vector<8x8xf32>
    %cst_9 = arith.constant dense<0xFF800000> : vector<8xf32>
    %21 = vector.multi_reduction <maximumf>, %20, %cst_9 [1] : vector<8x8xf32> to vector<8xf32>
    %22 = vector.shape_cast %21 : vector<8xf32> to vector<8x1xf32>
    %23 = vector.broadcast %22 : vector<8x1xf32> to vector<8x8xf32>
    %24 = arith.subf %20, %23 : vector<8x8xf32>
    %25 = math.exp %24 : vector<8x8xf32>
    %cst_10 = arith.constant dense<0.000000e+00> : vector<8xf32>
    %26 = vector.multi_reduction <add>, %25, %cst_10 [1] : vector<8x8xf32> to vector<8xf32>
    %27 = vector.shape_cast %26 : vector<8xf32> to vector<8x1xf32>
    %28 = vector.broadcast %27 : vector<8x1xf32> to vector<8x8xf32>
    %29 = arith.divf %25, %28 : vector<8x8xf32>
    %cst_11 = arith.constant dense<0.000000e+00> : vector<8x32xf32>
    %30 = tpu.matmul %29, %15, %cst_11 {dimension_numbers = #tpu.dot_dimension_numbers<[1], [0], [0], [1], [0, 0, 1, 1], [], []>} : vector<8x8xf32>, vector<8x32xf32>, vector<8x32xf32> -> vector<8x32xf32>
    %31 = vector.extract_strided_slice %7 {offsets = [0, 32], sizes = [8, 32], strides = [1, 1]} : vector<8x128xf32> to vector<8x32xf32>
    %32 = vector.extract_strided_slice %8 {offsets = [0, 32], sizes = [8, 32], strides = [1, 1]} : vector<8x128xf32> to vector<8x32xf32>
    %33 = vector.extract_strided_slice %9 {offsets = [0, 32], sizes = [8, 32], strides = [1, 1]} : vector<8x128xf32> to vector<8x32xf32>
    %cst_12 = arith.constant dense<0.000000e+00> : vector<8x8xf32>
    %34 = tpu.matmul %31, %32, %cst_12 {dimension_numbers = #tpu.dot_dimension_numbers<[1], [1], [0], [0], [0, 0, 1, 0], [], []>} : vector<8x32xf32>, vector<8x32xf32>, vector<8x8xf32> -> vector<8x8xf32>
    %cst_13 = arith.constant 0.176776692 : f32
    %35 = vector.broadcast %cst_13 : f32 to vector<8x8xf32>
    %36 = arith.mulf %34, %35 : vector<8x8xf32>
    %cst_14 = arith.constant 0xFF800000 : f32
    %37 = vector.broadcast %cst_14 : f32 to vector<8x8xf32>
    %38 = arith.select %12, %36, %37 : vector<8x8xi1>, vector<8x8xf32>
    %cst_15 = arith.constant dense<0xFF800000> : vector<8xf32>
    %39 = vector.multi_reduction <maximumf>, %38, %cst_15 [1] : vector<8x8xf32> to vector<8xf32>
    %40 = vector.shape_cast %39 : vector<8xf32> to vector<8x1xf32>
    %41 = vector.broadcast %40 : vector<8x1xf32> to vector<8x8xf32>
    %42 = arith.subf %38, %41 : vector<8x8xf32>
    %43 = math.exp %42 : vector<8x8xf32>
    %cst_16 = arith.constant dense<0.000000e+00> : vector<8xf32>
    %44 = vector.multi_reduction <add>, %43, %cst_16 [1] : vector<8x8xf32> to vector<8xf32>
    %45 = vector.shape_cast %44 : vector<8xf32> to vector<8x1xf32>
    %46 = vector.broadcast %45 : vector<8x1xf32> to vector<8x8xf32>
    %47 = arith.divf %43, %46 : vector<8x8xf32>
    %cst_17 = arith.constant dense<0.000000e+00> : vector<8x32xf32>
    %48 = tpu.matmul %47, %33, %cst_17 {dimension_numbers = #tpu.dot_dimension_numbers<[1], [0], [0], [1], [0, 0, 1, 1], [], []>} : vector<8x8xf32>, vector<8x32xf32>, vector<8x32xf32> -> vector<8x32xf32>
    %49 = vector.extract_strided_slice %7 {offsets = [0, 64], sizes = [8, 32], strides = [1, 1]} : vector<8x128xf32> to vector<8x32xf32>
    %50 = vector.extract_strided_slice %8 {offsets = [0, 64], sizes = [8, 32], strides = [1, 1]} : vector<8x128xf32> to vector<8x32xf32>
    %51 = vector.extract_strided_slice %9 {offsets = [0, 64], sizes = [8, 32], strides = [1, 1]} : vector<8x128xf32> to vector<8x32xf32>
    %cst_18 = arith.constant dense<0.000000e+00> : vector<8x8xf32>
    %52 = tpu.matmul %49, %50, %cst_18 {dimension_numbers = #tpu.dot_dimension_numbers<[1], [1], [0], [0], [0, 0, 1, 0], [], []>} : vector<8x32xf32>, vector<8x32xf32>, vector<8x8xf32> -> vector<8x8xf32>
    %cst_19 = arith.constant 0.176776692 : f32
    %53 = vector.broadcast %cst_19 : f32 to vector<8x8xf32>
    %54 = arith.mulf %52, %53 : vector<8x8xf32>
    %cst_20 = arith.constant 0xFF800000 : f32
    %55 = vector.broadcast %cst_20 : f32 to vector<8x8xf32>
    %56 = arith.select %12, %54, %55 : vector<8x8xi1>, vector<8x8xf32>
    %cst_21 = arith.constant dense<0xFF800000> : vector<8xf32>
    %57 = vector.multi_reduction <maximumf>, %56, %cst_21 [1] : vector<8x8xf32> to vector<8xf32>
    %58 = vector.shape_cast %57 : vector<8xf32> to vector<8x1xf32>
    %59 = vector.broadcast %58 : vector<8x1xf32> to vector<8x8xf32>
    %60 = arith.subf %56, %59 : vector<8x8xf32>
    %61 = math.exp %60 : vector<8x8xf32>
    %cst_22 = arith.constant dense<0.000000e+00> : vector<8xf32>
    %62 = vector.multi_reduction <add>, %61, %cst_22 [1] : vector<8x8xf32> to vector<8xf32>
    %63 = vector.shape_cast %62 : vector<8xf32> to vector<8x1xf32>
    %64 = vector.broadcast %63 : vector<8x1xf32> to vector<8x8xf32>
    %65 = arith.divf %61, %64 : vector<8x8xf32>
    %cst_23 = arith.constant dense<0.000000e+00> : vector<8x32xf32>
    %66 = tpu.matmul %65, %51, %cst_23 {dimension_numbers = #tpu.dot_dimension_numbers<[1], [0], [0], [1], [0, 0, 1, 1], [], []>} : vector<8x8xf32>, vector<8x32xf32>, vector<8x32xf32> -> vector<8x32xf32>
    %67 = vector.extract_strided_slice %7 {offsets = [0, 96], sizes = [8, 32], strides = [1, 1]} : vector<8x128xf32> to vector<8x32xf32>
    %68 = vector.extract_strided_slice %8 {offsets = [0, 96], sizes = [8, 32], strides = [1, 1]} : vector<8x128xf32> to vector<8x32xf32>
    %69 = vector.extract_strided_slice %9 {offsets = [0, 96], sizes = [8, 32], strides = [1, 1]} : vector<8x128xf32> to vector<8x32xf32>
    %cst_24 = arith.constant dense<0.000000e+00> : vector<8x8xf32>
    %70 = tpu.matmul %67, %68, %cst_24 {dimension_numbers = #tpu.dot_dimension_numbers<[1], [1], [0], [0], [0, 0, 1, 0], [], []>} : vector<8x32xf32>, vector<8x32xf32>, vector<8x8xf32> -> vector<8x8xf32>
    %cst_25 = arith.constant 0.176776692 : f32
    %71 = vector.broadcast %cst_25 : f32 to vector<8x8xf32>
    %72 = arith.mulf %70, %71 : vector<8x8xf32>
    %cst_26 = arith.constant 0xFF800000 : f32
    %73 = vector.broadcast %cst_26 : f32 to vector<8x8xf32>
    %74 = arith.select %12, %72, %73 : vector<8x8xi1>, vector<8x8xf32>
    %cst_27 = arith.constant dense<0xFF800000> : vector<8xf32>
    %75 = vector.multi_reduction <maximumf>, %74, %cst_27 [1] : vector<8x8xf32> to vector<8xf32>
    %76 = vector.shape_cast %75 : vector<8xf32> to vector<8x1xf32>
    %77 = vector.broadcast %76 : vector<8x1xf32> to vector<8x8xf32>
    %78 = arith.subf %74, %77 : vector<8x8xf32>
    %79 = math.exp %78 : vector<8x8xf32>
    %cst_28 = arith.constant dense<0.000000e+00> : vector<8xf32>
    %80 = vector.multi_reduction <add>, %79, %cst_28 [1] : vector<8x8xf32> to vector<8xf32>
    %81 = vector.shape_cast %80 : vector<8xf32> to vector<8x1xf32>
    %82 = vector.broadcast %81 : vector<8x1xf32> to vector<8x8xf32>
    %83 = arith.divf %79, %82 : vector<8x8xf32>
    %cst_29 = arith.constant dense<0.000000e+00> : vector<8x32xf32>
    %84 = tpu.matmul %83, %69, %cst_29 {dimension_numbers = #tpu.dot_dimension_numbers<[1], [0], [0], [1], [0, 0, 1, 1], [], []>} : vector<8x8xf32>, vector<8x32xf32>, vector<8x32xf32> -> vector<8x32xf32>
    %85 = tpu.concatenate %30, %48, %66, %84 in 1 : vector<8x32xf32>, vector<8x32xf32>, vector<8x32xf32>, vector<8x32xf32> -> vector<8x128xf32>
    %c0_30 = arith.constant 0 : index
    %c0_31 = arith.constant 0 : index
    %86 = vector.load %arg4[%c0_30, %c0_31] : memref<128x128xf32, #tpu.memory_space<vmem>>, vector<128x128xf32>
    %cst_32 = arith.constant dense<0.000000e+00> : vector<8x128xf32>
    %87 = tpu.matmul %85, %86, %cst_32 {dimension_numbers = #tpu.dot_dimension_numbers<[1], [0], [0], [1], [0, 0, 1, 1], [], []>} : vector<8x128xf32>, vector<128x128xf32>, vector<8x128xf32> -> vector<8x128xf32>
    %c0_33 = arith.constant 0 : index
    %c0_34 = arith.constant 0 : index
    %88 = vector.load %arg5[%c0_33, %c0_34] : memref<1x128xf32, #tpu.memory_space<vmem>>, vector<1x128xf32>
    %89 = vector.broadcast %88 : vector<1x128xf32> to vector<8x128xf32>
    %90 = arith.addf %87, %89 : vector<8x128xf32>
    %c0_35 = arith.constant 0 : index
    %c0_36 = arith.constant 0 : index
    %91 = vector.load %arg6[%c0_35, %c0_36] : memref<1x128xf32, #tpu.memory_space<vmem>>, vector<1x128xf32>
    %c0_37 = arith.constant 0 : index
    %c0_38 = arith.constant 0 : index
    %92 = vector.load %arg7[%c0_37, %c0_38] : memref<1x128xf32, #tpu.memory_space<vmem>>, vector<1x128xf32>
    %cst_39 = arith.constant dense<0.000000e+00> : vector<8xf32>
    %93 = vector.multi_reduction <add>, %90, %cst_39 [1] : vector<8x128xf32> to vector<8xf32>
    %94 = vector.shape_cast %93 : vector<8xf32> to vector<8x1xf32>
    %cst_40 = arith.constant 1.280000e+02 : f32
    %95 = vector.broadcast %cst_40 : f32 to vector<8x1xf32>
    %96 = arith.divf %94, %95 : vector<8x1xf32>
    %97 = vector.broadcast %96 : vector<8x1xf32> to vector<8x128xf32>
    %98 = arith.subf %90, %97 : vector<8x128xf32>
    %99 = arith.mulf %98, %98 : vector<8x128xf32>
    %cst_41 = arith.constant dense<0.000000e+00> : vector<8xf32>
    %100 = vector.multi_reduction <add>, %99, %cst_41 [1] : vector<8x128xf32> to vector<8xf32>
    %101 = vector.shape_cast %100 : vector<8xf32> to vector<8x1xf32>
    %cst_42 = arith.constant 1.280000e+02 : f32
    %102 = vector.broadcast %cst_42 : f32 to vector<8x1xf32>
    %103 = arith.divf %101, %102 : vector<8x1xf32>
    %104 = vector.broadcast %96 : vector<8x1xf32> to vector<8x128xf32>
    %105 = arith.subf %90, %104 : vector<8x128xf32>
    %cst_43 = arith.constant 9.99999974E-6 : f32
    %106 = vector.broadcast %cst_43 : f32 to vector<8x1xf32>
    %107 = arith.addf %103, %106 : vector<8x1xf32>
    %108 = math.rsqrt %107 : vector<8x1xf32>
    %109 = vector.broadcast %108 : vector<8x1xf32> to vector<8x128xf32>
    %110 = arith.mulf %105, %109 : vector<8x128xf32>
    %111 = vector.broadcast %91 : vector<1x128xf32> to vector<8x128xf32>
    %112 = arith.mulf %110, %111 : vector<8x128xf32>
    %113 = vector.broadcast %92 : vector<1x128xf32> to vector<8x128xf32>
    %114 = arith.addf %112, %113 : vector<8x128xf32>
    %115 = arith.addf %1, %114 : vector<8x128xf32>
    %c0_44 = arith.constant 0 : index
    %c0_45 = arith.constant 0 : index
    %116 = vector.load %arg8[%c0_44, %c0_45] : memref<128x512xf32, #tpu.memory_space<vmem>>, vector<128x512xf32>
    %cst_46 = arith.constant dense<0.000000e+00> : vector<8x512xf32>
    %117 = tpu.matmul %115, %116, %cst_46 {dimension_numbers = #tpu.dot_dimension_numbers<[1], [0], [0], [1], [0, 0, 1, 1], [], []>} : vector<8x128xf32>, vector<128x512xf32>, vector<8x512xf32> -> vector<8x512xf32>
    %c0_47 = arith.constant 0 : index
    %c0_48 = arith.constant 0 : index
    %118 = vector.load %arg9[%c0_47, %c0_48] : memref<1x512xf32, #tpu.memory_space<vmem>>, vector<1x512xf32>
    %119 = vector.broadcast %118 : vector<1x512xf32> to vector<8x512xf32>
    %120 = arith.addf %117, %119 : vector<8x512xf32>
    %cst_49 = arith.constant 5.000000e-01 : f32
    %121 = vector.broadcast %cst_49 : f32 to vector<8x512xf32>
    %122 = arith.mulf %121, %120 : vector<8x512xf32>
    %cst_50 = arith.constant 4.471500e-02 : f32
    %123 = vector.broadcast %cst_50 : f32 to vector<8x512xf32>
    %124 = arith.mulf %123, %120 : vector<8x512xf32>
    %125 = arith.mulf %124, %120 : vector<8x512xf32>
    %126 = arith.mulf %125, %120 : vector<8x512xf32>
    %127 = arith.addf %120, %126 : vector<8x512xf32>
    %cst_51 = arith.constant 0.797884583 : f32
    %128 = vector.broadcast %cst_51 : f32 to vector<8x512xf32>
    %129 = arith.mulf %128, %127 : vector<8x512xf32>
    %130 = math.tanh %129 : vector<8x512xf32>
    %cst_52 = arith.constant 1.000000e+00 : f32
    %131 = vector.broadcast %cst_52 : f32 to vector<8x512xf32>
    %132 = arith.addf %131, %130 : vector<8x512xf32>
    %133 = arith.mulf %122, %132 : vector<8x512xf32>
    %c0_53 = arith.constant 0 : index
    %c0_54 = arith.constant 0 : index
    %134 = vector.load %arg10[%c0_53, %c0_54] : memref<512x128xf32, #tpu.memory_space<vmem>>, vector<512x128xf32>
    %cst_55 = arith.constant dense<0.000000e+00> : vector<8x128xf32>
    %135 = tpu.matmul %133, %134, %cst_55 {dimension_numbers = #tpu.dot_dimension_numbers<[1], [0], [0], [1], [0, 0, 1, 1], [], []>} : vector<8x512xf32>, vector<512x128xf32>, vector<8x128xf32> -> vector<8x128xf32>
    %c0_56 = arith.constant 0 : index
    %c0_57 = arith.constant 0 : index
    %136 = vector.load %arg11[%c0_56, %c0_57] : memref<1x128xf32, #tpu.memory_space<vmem>>, vector<1x128xf32>
    %137 = vector.broadcast %136 : vector<1x128xf32> to vector<8x128xf32>
    %138 = arith.addf %135, %137 : vector<8x128xf32>
    %c0_58 = arith.constant 0 : index
    %c0_59 = arith.constant 0 : index
    %139 = vector.load %arg12[%c0_58, %c0_59] : memref<1x128xf32, #tpu.memory_space<vmem>>, vector<1x128xf32>
    %c0_60 = arith.constant 0 : index
    %c0_61 = arith.constant 0 : index
    %140 = vector.load %arg13[%c0_60, %c0_61] : memref<1x128xf32, #tpu.memory_space<vmem>>, vector<1x128xf32>
    %cst_62 = arith.constant dense<0.000000e+00> : vector<8xf32>
    %141 = vector.multi_reduction <add>, %138, %cst_62 [1] : vector<8x128xf32> to vector<8xf32>
    %142 = vector.shape_cast %141 : vector<8xf32> to vector<8x1xf32>
    %cst_63 = arith.constant 1.280000e+02 : f32
    %143 = vector.broadcast %cst_63 : f32 to vector<8x1xf32>
    %144 = arith.divf %142, %143 : vector<8x1xf32>
    %145 = vector.broadcast %144 : vector<8x1xf32> to vector<8x128xf32>
    %146 = arith.subf %138, %145 : vector<8x128xf32>
    %147 = arith.mulf %146, %146 : vector<8x128xf32>
    %cst_64 = arith.constant dense<0.000000e+00> : vector<8xf32>
    %148 = vector.multi_reduction <add>, %147, %cst_64 [1] : vector<8x128xf32> to vector<8xf32>
    %149 = vector.shape_cast %148 : vector<8xf32> to vector<8x1xf32>
    %cst_65 = arith.constant 1.280000e+02 : f32
    %150 = vector.broadcast %cst_65 : f32 to vector<8x1xf32>
    %151 = arith.divf %149, %150 : vector<8x1xf32>
    %152 = vector.broadcast %144 : vector<8x1xf32> to vector<8x128xf32>
    %153 = arith.subf %138, %152 : vector<8x128xf32>
    %cst_66 = arith.constant 9.99999974E-6 : f32
    %154 = vector.broadcast %cst_66 : f32 to vector<8x1xf32>
    %155 = arith.addf %151, %154 : vector<8x1xf32>
    %156 = math.rsqrt %155 : vector<8x1xf32>
    %157 = vector.broadcast %156 : vector<8x1xf32> to vector<8x128xf32>
    %158 = arith.mulf %153, %157 : vector<8x128xf32>
    %159 = vector.broadcast %139 : vector<1x128xf32> to vector<8x128xf32>
    %160 = arith.mulf %158, %159 : vector<8x128xf32>
    %161 = vector.broadcast %140 : vector<1x128xf32> to vector<8x128xf32>
    %162 = arith.addf %160, %161 : vector<8x128xf32>
    %163 = arith.addf %115, %162 : vector<8x128xf32>
    %c0_67 = arith.constant 0 : index
    %c0_68 = arith.constant 0 : index
    %c0_69 = arith.constant 0 : index
    %164 = vector.load %arg14[%c0_67, %c0_68, %c0_69] : memref<1x8x128xf32, #tpu.memory_space<vmem>>, vector<1x8x128xf32>
    %165 = vector.shape_cast %164 : vector<1x8x128xf32> to vector<8x128xf32>
    %166 = vector.shape_cast %163 : vector<8x128xf32> to vector<1x8x128xf32>
    tpu.vector_store %arg14[%c0_67, %c0_68, %c0_69], %166 {strides = array<i32>} : memref<1x8x128xf32, #tpu.memory_space<vmem>>, vector<1x8x128xf32>,
    return
  }
  func.func @transform_0(%arg0: i32) -> (i32, i32, i32) {
    %c0_i32 = arith.constant 0 : i32
    %c0_i32_0 = arith.constant 0 : i32
    %c0_i32_1 = arith.constant 0 : i32
    return %arg0, %c0_i32, %c0_i32_0 : i32, i32, i32
  }
  func.func @transform_1(%arg0: i32) -> (i32, i32) {
    %c0_i32 = arith.constant 0 : i32
    %c0_i32_0 = arith.constant 0 : i32
    %c0_i32_1 = arith.constant 0 : i32
    return %c0_i32, %c0_i32_0 : i32, i32
  }
  func.func @transform_2(%arg0: i32) -> (i32, i32) {
    %c0_i32 = arith.constant 0 : i32
    %c0_i32_0 = arith.constant 0 : i32
    %c0_i32_1 = arith.constant 0 : i32
    return %c0_i32, %c0_i32_0 : i32, i32
  }
  func.func @transform_3(%arg0: i32) -> (i32, i32) {
    %c0_i32 = arith.constant 0 : i32
    %c0_i32_0 = arith.constant 0 : i32
    %c0_i32_1 = arith.constant 0 : i32
    return %c0_i32, %c0_i32_0 : i32, i32
  }
  func.func @transform_4(%arg0: i32) -> (i32, i32) {
    %c0_i32 = arith.constant 0 : i32
    %c0_i32_0 = arith.constant 0 : i32
    %c0_i32_1 = arith.constant 0 : i32
    return %c0_i32, %c0_i32_0 : i32, i32
  }
  func.func @transform_5(%arg0: i32) -> (i32, i32) {
    %c0_i32 = arith.constant 0 : i32
    %c0_i32_0 = arith.constant 0 : i32
    %c0_i32_1 = arith.constant 0 : i32
    return %c0_i32, %c0_i32_0 : i32, i32
  }
  func.func @transform_6(%arg0: i32) -> (i32, i32) {
    %c0_i32 = arith.constant 0 : i32
    %c0_i32_0 = arith.constant 0 : i32
    %c0_i32_1 = arith.constant 0 : i32
    return %c0_i32, %c0_i32_0 : i32, i32
  }
  func.func @transform_7(%arg0: i32) -> (i32, i32) {
    %c0_i32 = arith.constant 0 : i32
    %c0_i32_0 = arith.constant 0 : i32
    %c0_i32_1 = arith.constant 0 : i32
    return %c0_i32, %c0_i32_0 : i32, i32
  }
  func.func @transform_8(%arg0: i32) -> (i32, i32) {
    %c0_i32 = arith.constant 0 : i32
    %c0_i32_0 = arith.constant 0 : i32
    %c0_i32_1 = arith.constant 0 : i32
    return %c0_i32, %c0_i32_0 : i32, i32
  }
  func.func @transform_9(%arg0: i32) -> (i32, i32) {
    %c0_i32 = arith.constant 0 : i32
    %c0_i32_0 = arith.constant 0 : i32
    %c0_i32_1 = arith.constant 0 : i32
    return %c0_i32, %c0_i32_0 : i32, i32
  }
  func.func @transform_10(%arg0: i32) -> (i32, i32) {
    %c0_i32 = arith.constant 0 : i32
    %c0_i32_0 = arith.constant 0 : i32
    %c0_i32_1 = arith.constant 0 : i32
    return %c0_i32, %c0_i32_0 : i32, i32
  }
  func.func @transform_11(%arg0: i32) -> (i32, i32) {
    %c0_i32 = arith.constant 0 : i32
    %c0_i32_0 = arith.constant 0 : i32
    %c0_i32_1 = arith.constant 0 : i32
    return %c0_i32, %c0_i32_0 : i32, i32
  }
  func.func @transform_12(%arg0: i32) -> (i32, i32) {
    %c0_i32 = arith.constant 0 : i32
    %c0_i32_0 = arith.constant 0 : i32
    %c0_i32_1 = arith.constant 0 : i32
    return %c0_i32, %c0_i32_0 : i32, i32
  }
  func.func @transform_13(%arg0: i32) -> (i32, i32, i32) {
    %c0_i32 = arith.constant 0 : i32
    %c0_i32_0 = arith.constant 0 : i32
    %c0_i32_1 = arith.constant 0 : i32
    return %arg0, %c0_i32, %c0_i32_0 : i32, i32, i32
  }
}

</mosaic_0001>

<llo_original>
// kernel: tpu_custom_call.1
$region0: #{tpu_custom_call.1}
  #allocation0 [shape = 'u32[]', space=smem, size = 0x4, offset = 0x4, fixed_abs, tag = 'smem constant byte address 0x4 - core index']
  #allocation1 [shape = 'u32[144,128]{1,0:T(1,128)}', space=vmem, size = 0x12000, scoped, tag = 'internal scratch']
  %s0 = inlined_call_operand.hbm [shape: f32[2,8,128], index: 0, kind: input, shape index: {}]
  %s1 = inlined_call_operand.hbm [shape: f32[128,384], index: 1, kind: input, shape index: {}]
  %s2 = inlined_call_operand.vmem [shape: f32[1,384], index: 2, kind: input, shape index: {}]
  %s3 = inlined_call_operand.hbm [shape: f32[128,128], index: 3, kind: input, shape index: {}]
  %s4 = inlined_call_operand.vmem [shape: f32[1,128], index: 4, kind: input, shape index: {}]
  %s5 = inlined_call_operand.vmem [shape: f32[1,128], index: 5, kind: input, shape index: {}]
  %s6 = inlined_call_operand.vmem [shape: f32[1,128], index: 6, kind: input, shape index: {}]
  %s7 = inlined_call_operand.hbm [shape: f32[128,512], index: 7, kind: input, shape index: {}]
  %s8 = inlined_call_operand.vmem [shape: f32[1,512], index: 8, kind: input, shape index: {}]
  %s9 = inlined_call_operand.hbm [shape: f32[512,128], index: 9, kind: input, shape index: {}]
  %s10 = inlined_call_operand.vmem [shape: f32[1,128], index: 10, kind: input, shape index: {}]
  %s11 = inlined_call_operand.vmem [shape: f32[1,128], index: 11, kind: input, shape index: {}]
  %s12 = inlined_call_operand.vmem [shape: f32[1,128], index: 12, kind: input, shape index: {}]
  %s13 = inlined_call_operand.hbm [shape: f32[2,8,128], index: 13, kind: output, shape index: {}]
  %s14 = sld [smem:[#allocation0]]
  $region105: #{tpu_custom_call.1} parent=0
    _
  %s16 = ssub.s32 1, %s14
  %s17 = scalar_select 0, %s16, %s14
  $region1: #{tpu_custom_call.1} parent=0
    #allocation2 [shape = 'u8[8192]{0}', space=vmem, size = 0x2000, scoped, tag = 'input window, operand 0']
    #allocation3 [shape = 's32[2]{0}', space=sflag, size = 0x8, scoped, tag = 'scoped memory for tpu_custom_call.1']
    #allocation4 [shape = 's32[2]{0}', space=sflag, size = 0x8, scoped, tag = 'scoped memory for tpu_custom_call.1']
    #allocation5 [shape = 'u8[196608]{0}', space=vmem, size = 0x30000, scoped, tag = 'input window, operand 1, single buffered']
    #allocation6 [shape = 's32[1]{0}', space=sflag, size = 0x4, scoped, tag = 'scoped memory for tpu_custom_call.1']
    #allocation7 [shape = 'u8[65536]{0}', space=vmem, size = 0x10000, scoped, tag = 'input window, operand 3, single buffered']
    #allocation8 [shape = 'u8[262144]{0}', space=vmem, size = 0x40000, scoped, tag = 'input window, operand 7, single buffered']
    #allocation9 [shape = 's32[1]{0}', space=sflag, size = 0x4, scoped, tag = 'scoped memory for tpu_custom_call.1']
    #allocation10 [shape = 'u8[262144]{0}', space=vmem, size = 0x40000, scoped, tag = 'input window, operand 9, single buffered']
    #allocation11 [shape = 'u8[8192]{0}', space=vmem, size = 0x2000, scoped, tag = 'output window, operand 0']
    %18 = vsyncpa [#allocation3], 0
    %s19 = scalar_lea.sflag [#allocation3], 1
    %20 = vsyncpa %s19, 0
    %21 = vsyncpa [#allocation6], 0
    %22 = vsyncpa [#allocation9], 0
    %23 = vsyncpa [#allocation4], 0
    %s24 = scalar_lea.sflag [#allocation4], 1
    %25 = vsyncpa %s24, 0
    loop: start=0, step=1, limit=4
    $region2: #{tpu_custom_call.1} parent=1 // loop_pre_header
      _
    $region3: #{tpu_custom_call.1} parent=1 // loop_header
      %s27 = sphi 0, %s31
      %p28 = scmp.ge.s32.totalorder %s27, 4
      %s37 = sphi 0, %s39
      %s40 = sphi 0, %s37
      %s41 = sphi 0, %s40
      %s57 = sphi 0, %s41
      %s61 = sphi 0, %s61
      %s63 = sphi 0, %s61
      %s64 = sphi 0, %s63
      %s78 = sphi 0, %s64
      %s82 = sphi 0, %s82
      %s84 = sphi 0, %s82
      %s85 = sphi 0, %s84
      %s99 = sphi 0, %s85
      %s103 = sphi 0, %s103
      %s105 = sphi 0, %s103
      %s106 = sphi 0, %s105
      %s120 = sphi 0, %s106
      %s124 = sphi 0, %s124
      %s126 = sphi 0, %s124
      %s127 = sphi 0, %s126
      %s141 = sphi 0, %s127
      %s145 = sphi 0, %s145
      %s147 = sphi 0, %s145
      %s148 = sphi 0, %s147
      %s162 = sphi 0, %s148
      %s166 = sphi 0, %s166
      %s168 = sphi 0, %s166
      %s169 = sphi 0, %s168
      %s183 = sphi 0, %s169
      %s187 = sphi 0, %s187
      %s189 = sphi 0, %s187
      %s190 = sphi 0, %s189
      %s204 = sphi 0, %s190
      %s208 = sphi 0, %s208
      %s210 = sphi 0, %s208
      %s211 = sphi 0, %s210
      %s225 = sphi 0, %s211
      %s229 = sphi 0, %s229
      %s231 = sphi 0, %s229
      %s232 = sphi 0, %s231
      %s246 = sphi 0, %s232
      %s250 = sphi 0, %s250
      %s252 = sphi 0, %s250
      %s253 = sphi 0, %s252
      %s267 = sphi 0, %s253
      %s271 = sphi 0, %s271
      %s273 = sphi 0, %s271
      %s274 = sphi 0, %s273
      %s288 = sphi 0, %s274
      %s292 = sphi 0, %s292
      %s294 = sphi 0, %s292
      %s295 = sphi 0, %s294
      %s309 = sphi 0, %s295
      %s315 = sphi 0, %s317
      %s318 = sphi 0, %s315
      %s319 = sphi 0, %s318
      %s335 = sphi 0, %s319
    $region4: #{tpu_custom_call.1} parent=1 // loop_header_branch
      %30 = sbr.rel (%p28) target = $region8
    $region5: #{tpu_custom_call.1} parent=1 // loop_body
      %s32 = ssub.s32 %s27, 1
      %s33 = ssub.s32 %s27, 2
      %s34 = sadd.s32 %s27, 1
      %s35 = ssub.s32 %s27, %s34
      %p36 = scmp.eq.s32.totalorder %s35, 0
      %s38 = sadd.s32 %s37, 1
      %s39 = scalar_select %p36, %s37, %s38
      %p42 = pneg %p36
      %p43 = scmp.eq.s32.totalorder %s27, 1
      %p44 = por %p42, %p43
      %p45 = scmp.ne.s32.totalorder %s37, %s40
      %p46 = scmp.eq.s32.totalorder %s27, 0
      %p47 = por %p45, %p46
      %p48 = scmp.ne.s32.totalorder %s37, %s40
      %p49 = scmp.eq.s32.totalorder %s32, 1
      %p50 = por %p48, %p49
      %p51 = scmp.ne.s32.totalorder %s40, %s41
      %p52 = scmp.eq.s32.totalorder %s32, 0
      %p53 = por %p51, %p52
      %p54 = scmp.ne.s32.totalorder %s40, %s41
      %p55 = scmp.eq.s32.totalorder %s33, 1
      %p56 = por %p54, %p55
      %p58 = scmp.ne.s32.totalorder %s41, %s57
      %p59 = scmp.eq.s32.totalorder %s33, 0
      %p60 = por %p58, %p59
      %s62 = sadd.s32 %s61, 1
      %p65 = scmp.eq.s32.totalorder %s27, 1
      %p66 = scmp.ne.s32.totalorder %s61, %s63
      %p67 = scmp.eq.s32.totalorder %s27, 0
      %p68 = por %p66, %p67
      %p69 = scmp.ne.s32.totalorder %s61, %s63
      %p70 = scmp.eq.s32.totalorder %s32, 1
      %p71 = por %p69, %p70
      %p72 = scmp.ne.s32.totalorder %s63, %s64
      %p73 = scmp.eq.s32.totalorder %s32, 0
      %p74 = por %p72, %p73
      %p75 = scmp.ne.s32.totalorder %s63, %s64
      %p76 = scmp.eq.s32.totalorder %s33, 1
      %p77 = por %p75, %p76
      %p79 = scmp.ne.s32.totalorder %s64, %s78
      %p80 = scmp.eq.s32.totalorder %s33, 0
      %p81 = por %p79, %p80
      %s83 = sadd.s32 %s82, 1
      %p86 = scmp.eq.s32.totalorder %s27, 1
      %p87 = scmp.ne.s32.totalorder %s82, %s84
      %p88 = scmp.eq.s32.totalorder %s27, 0
      %p89 = por %p87, %p88
      %p90 = scmp.ne.s32.totalorder %s82, %s84
      %p91 = scmp.eq.s32.totalorder %s32, 1
      %p92 = por %p90, %p91
      %p93 = scmp.ne.s32.totalorder %s84, %s85
      %p94 = scmp.eq.s32.totalorder %s32, 0
      %p95 = por %p93, %p94
      %p96 = scmp.ne.s32.totalorder %s84, %s85
      %p97 = scmp.eq.s32.totalorder %s33, 1
      %p98 = por %p96, %p97
      %p100 = scmp.ne.s32.totalorder %s85, %s99
      %p101 = scmp.eq.s32.totalorder %s33, 0
      %p102 = por %p100, %p101
      %s104 = sadd.s32 %s103, 1
      %p107 = scmp.eq.s32.totalorder %s27, 1
      %p108 = scmp.ne.s32.totalorder %s103, %s105
      %p109 = scmp.eq.s32.totalorder %s27, 0
      %p110 = por %p108, %p109
      %p111 = scmp.ne.s32.totalorder %s103, %s105
      %p112 = scmp.eq.s32.totalorder %s32, 1
      %p113 = por %p111, %p112
      %p114 = scmp.ne.s32.totalorder %s105, %s106
      %p115 = scmp.eq.s32.totalorder %s32, 0
      %p116 = por %p114, %p115
      %p117 = scmp.ne.s32.totalorder %s105, %s106
      %p118 = scmp.eq.s32.totalorder %s33, 1
      %p119 = por %p117, %p118
      %p121 = scmp.ne.s32.totalorder %s106, %s120
      %p122 = scmp.eq.s32.totalorder %s33, 0
      %p123 = por %p121, %p122
      %s125 = sadd.s32 %s124, 1
      %p128 = scmp.eq.s32.totalorder %s27, 1
      %p129 = scmp.ne.s32.totalorder %s124, %s126
      %p130 = scmp.eq.s32.totalorder %s27, 0
      %p131 = por %p129, %p130
      %p132 = scmp.ne.s32.totalorder %s124, %s126
      %p133 = scmp.eq.s32.totalorder %s32, 1
      %p134 = por %p132, %p133
      %p135 = scmp.ne.s32.totalorder %s126, %s127
      %p136 = scmp.eq.s32.totalorder %s32, 0
      %p137 = por %p135, %p136
      %p138 = scmp.ne.s32.totalorder %s126, %s127
      %p139 = scmp.eq.s32.totalorder %s33, 1
      %p140 = por %p138, %p139
      %p142 = scmp.ne.s32.totalorder %s127, %s141
      %p143 = scmp.eq.s32.totalorder %s33, 0
      %p144 = por %p142, %p143
      %s146 = sadd.s32 %s145, 1
      %p149 = scmp.eq.s32.totalorder %s27, 1
      %p150 = scmp.ne.s32.totalorder %s145, %s147
      %p151 = scmp.eq.s32.totalorder %s27, 0
      %p152 = por %p150, %p151
      %p153 = scmp.ne.s32.totalorder %s145, %s147
      %p154 = scmp.eq.s32.totalorder %s32, 1
      %p155 = por %p153, %p154
      %p156 = scmp.ne.s32.totalorder %s147, %s148
      %p157 = scmp.eq.s32.totalorder %s32, 0
      %p158 = por %p156, %p157
      %p159 = scmp.ne.s32.totalorder %s147, %s148
      %p160 = scmp.eq.s32.totalorder %s33, 1
      %p161 = por %p159, %p160
      %p163 = scmp.ne.s32.totalorder %s148, %s162
      %p164 = scmp.eq.s32.totalorder %s33, 0
      %p165 = por %p163, %p164
      %s167 = sadd.s32 %s166, 1
      %p170 = scmp.eq.s32.totalorder %s27, 1
      %p171 = scmp.ne.s32.totalorder %s166, %s168
      %p172 = scmp.eq.s32.totalorder %s27, 0
      %p173 = por %p171, %p172
      %p174 = scmp.ne.s32.totalorder %s166, %s168
      %p175 = scmp.eq.s32.totalorder %s32, 1
      %p176 = por %p174, %p175
      %p177 = scmp.ne.s32.totalorder %s168, %s169
      %p178 = scmp.eq.s32.totalorder %s32, 0
      %p179 = por %p177, %p178
      %p180 = scmp.ne.s32.totalorder %s168, %s169
      %p181 = scmp.eq.s32.totalorder %s33, 1
      %p182 = por %p180, %p181
      %p184 = scmp.ne.s32.totalorder %s169, %s183
      %p185 = scmp.eq.s32.totalorder %s33, 0
      %p186 = por %p184, %p185
      %s188 = sadd.s32 %s187, 1
      %p191 = scmp.eq.s32.totalorder %s27, 1
      %p192 = scmp.ne.s32.totalorder %s187, %s189
      %p193 = scmp.eq.s32.totalorder %s27, 0
      %p194 = por %p192, %p193
      %p195 = scmp.ne.s32.totalorder %s187, %s189
      %p196 = scmp.eq.s32.totalorder %s32, 1
      %p197 = por %p195, %p196
      %p198 = scmp.ne.s32.totalorder %s189, %s190
      %p199 = scmp.eq.s32.totalorder %s32, 0
      %p200 = por %p198, %p199
      %p201 = scmp.ne.s32.totalorder %s189, %s190
      %p202 = scmp.eq.s32.totalorder %s33, 1
      %p203 = por %p201, %p202
      %p205 = scmp.ne.s32.totalorder %s190, %s204
      %p206 = scmp.eq.s32.totalorder %s33, 0
      %p207 = por %p205, %p206
      %s209 = sadd.s32 %s208, 1
      %p212 = scmp.eq.s32.totalorder %s27, 1
      %p213 = scmp.ne.s32.totalorder %s208, %s210
      %p214 = scmp.eq.s32.totalorder %s27, 0
      %p215 = por %p213, %p214
      %p216 = scmp.ne.s32.totalorder %s208, %s210
      %p217 = scmp.eq.s32.totalorder %s32, 1
      %p218 = por %p216, %p217
      %p219 = scmp.ne.s32.totalorder %s210, %s211
      %p220 = scmp.eq.s32.totalorder %s32, 0
      %p221 = por %p219, %p220
      %p222 = scmp.ne.s32.totalorder %s210, %s211
      %p223 = scmp.eq.s32.totalorder %s33, 1
      %p224 = por %p222, %p223
      %p226 = scmp.ne.s32.totalorder %s211, %s225
      %p227 = scmp.eq.s32.totalorder %s33, 0
      %p228 = por %p226, %p227
      %s230 = sadd.s32 %s229, 1
      %p233 = scmp.eq.s32.totalorder %s27, 1
      %p234 = scmp.ne.s32.totalorder %s229, %s231
      %p235 = scmp.eq.s32.totalorder %s27, 0
      %p236 = por %p234, %p235
      %p237 = scmp.ne.s32.totalorder %s229, %s231
      %p238 = scmp.eq.s32.totalorder %s32, 1
      %p239 = por %p237, %p238
      %p240 = scmp.ne.s32.totalorder %s231, %s232
      %p241 = scmp.eq.s32.totalorder %s32, 0
      %p242 = por %p240, %p241
      %p243 = scmp.ne.s32.totalorder %s231, %s232
      %p244 = scmp.eq.s32.totalorder %s33, 1
      %p245 = por %p243, %p244
      %p247 = scmp.ne.s32.totalorder %s232, %s246
      %p248 = scmp.eq.s32.totalorder %s33, 0
      %p249 = por %p247, %p248
      %s251 = sadd.s32 %s250, 1
      %p254 = scmp.eq.s32.totalorder %s27, 1
      %p255 = scmp.ne.s32.totalorder %s250, %s252
      %p256 = scmp.eq.s32.totalorder %s27, 0
      %p257 = por %p255, %p256
      %p258 = scmp.ne.s32.totalorder %s250, %s252
      %p259 = scmp.eq.s32.totalorder %s32, 1
      %p260 = por %p258, %p259
      %p261 = scmp.ne.s32.totalorder %s252, %s253
      %p262 = scmp.eq.s32.totalorder %s32, 0
      %p263 = por %p261, %p262
      %p264 = scmp.ne.s32.totalorder %s252, %s253
      %p265 = scmp.eq.s32.totalorder %s33, 1
      %p266 = por %p264, %p265
      %p268 = scmp.ne.s32.totalorder %s253, %s267
      %p269 = scmp.eq.s32.totalorder %s33, 0
      %p270 = por %p268, %p269
      %s272 = sadd.s32 %s271, 1
      %p275 = scmp.eq.s32.totalorder %s27, 1
      %p276 = scmp.ne.s32.totalorder %s271, %s273
      %p277 = scmp.eq.s32.totalorder %s27, 0
      %p278 = por %p276, %p277
      %p279 = scmp.ne.s32.totalorder %s271, %s273
      %p280 = scmp.eq.s32.totalorder %s32, 1
      %p281 = por %p279, %p280
      %p282 = scmp.ne.s32.totalorder %s273, %s274
      %p283 = scmp.eq.s32.totalorder %s32, 0
      %p284 = por %p282, %p283
      %p285 = scmp.ne.s32.totalorder %s273, %s274
      %p286 = scmp.eq.s32.totalorder %s33, 1
      %p287 = por %p285, %p286
      %p289 = scmp.ne.s32.totalorder %s274, %s288
      %p290 = scmp.eq.s32.totalorder %s33, 0
      %p291 = por %p289, %p290
      %s293 = sadd.s32 %s292, 1
      %p296 = scmp.eq.s32.totalorder %s27, 1
      %p297 = scmp.ne.s32.totalorder %s292, %s294
      %p298 = scmp.eq.s32.totalorder %s27, 0
      %p299 = por %p297, %p298
      %p300 = scmp.ne.s32.totalorder %s292, %s294
      %p301 = scmp.eq.s32.totalorder %s32, 1
      %p302 = por %p300, %p301
      %p303 = scmp.ne.s32.totalorder %s294, %s295
      %p304 = scmp.eq.s32.totalorder %s32, 0
      %p305 = por %p303, %p304
      %p306 = scmp.ne.s32.totalorder %s294, %s295
      %p307 = scmp.eq.s32.totalorder %s33, 1
      %p308 = por %p306, %p307
      %p310 = scmp.ne.s32.totalorder %s295, %s309
      %p311 = scmp.eq.s32.totalorder %s33, 0
      %p312 = por %p310, %p311
      %s313 = ssub.s32 %s27, %s34
      %p314 = scmp.eq.s32.totalorder %s313, 0
      %s316 = sadd.s32 %s315, 1
      %s317 = scalar_select %p314, %s315, %s316
      %p320 = pneg %p314
      %p321 = scmp.eq.s32.totalorder %s27, 1
      %p322 = por %p320, %p321
      %p323 = scmp.ne.s32.totalorder %s315, %s318
      %p324 = scmp.eq.s32.totalorder %s27, 0
      %p325 = por %p323, %p324
      %p326 = scmp.ne.s32.totalorder %s315, %s318
      %p327 = scmp.eq.s32.totalorder %s32, 1
      %p328 = por %p326, %p327
      %p329 = scmp.ne.s32.totalorder %s318, %s319
      %p330 = scmp.eq.s32.totalorder %s32, 0
      %p331 = por %p329, %p330
      %p332 = scmp.ne.s32.totalorder %s318, %s319
      %p333 = scmp.eq.s32.totalorder %s33, 1
      %p334 = por %p332, %p333
      %p336 = scmp.ne.s32.totalorder %s319, %s335
      %p337 = scmp.eq.s32.totalorder %s33, 0
      %p338 = por %p336, %p337
      %p339 = scmp.le.s32.totalorder 1, %s27
      %p340 = scmp.lt.s32.totalorder %s27, 3
      %p341 = pnand %p339, %p340
      %p342 = pneg %p341
      // Predicated region
      $region9: #{tpu_custom_call.1} parent=5 // pred_check
        _
      $region10: #{tpu_custom_call.1} parent=5 // pred_check_branch
        %344 = sbr.rel (%p341) target = $region12
      $region11: #{tpu_custom_call.1} parent=5 // pred_region
        %s345 = ssub.s32 %s27, 1
        // Predicated region
        $region13: #{tpu_custom_call.1} parent=11 // pred_check
          %p346 = pneg %p74
        $region14: #{tpu_custom_call.1} parent=11 // pred_check_branch
          %348 = sbr.rel (%p346) target = $region16
        $region15: #{tpu_custom_call.1} parent=11 // pred_region
          %s350 = ssub.s32 6144, 6144
          %351 = vsyncadd [#allocation6], %s350
          %s352 = sshll.u32 [#allocation5], 4
          %s353 = int_to_ptr.vmem [resolvable:$true] %s352
          %358 = dma.hbm_to_vmem [thread:$0]  %s1, 6144, %s353, [#allocation6], 384, 384, 24
        $region16: #{tpu_custom_call.1} parent=11 // pred_fallthru
          _
        // Predicated region
        $region17: #{tpu_custom_call.1} parent=11 // pred_check
          %p359 = pneg %p95
        $region18: #{tpu_custom_call.1} parent=11 // pred_check_branch
          %361 = sbr.rel (%p359) target = $region20
        $region19: #{tpu_custom_call.1} parent=11 // pred_region
          _
        $region20: #{tpu_custom_call.1} parent=11 // pred_fallthru
          _
        // Predicated region
        $region21: #{tpu_custom_call.1} parent=11 // pred_check
          %p362 = pneg %p116
        $region22: #{tpu_custom_call.1} parent=11 // pred_check_branch
          %364 = sbr.rel (%p362) target = $region24
        $region23: #{tpu_custom_call.1} parent=11 // pred_region
          %s366 = ssub.s32 2048, 2048
          %367 = vsyncadd [#allocation6], %s366
          %s368 = sshll.u32 [#allocation7], 4
          %s369 = int_to_ptr.vmem [resolvable:$true] %s368
          %374 = dma.hbm_to_vmem [thread:$0]  %s3, 2048, %s369, [#allocation6], 128, 128, 8
        $region24: #{tpu_custom_call.1} parent=11 // pred_fallthru
          _
        // Predicated region
        $region25: #{tpu_custom_call.1} parent=11 // pred_check
          %p375 = pneg %p137
        $region26: #{tpu_custom_call.1} parent=11 // pred_check_branch
          %377 = sbr.rel (%p375) target = $region28
        $region27: #{tpu_custom_call.1} parent=11 // pred_region
          _
        $region28: #{tpu_custom_call.1} parent=11 // pred_fallthru
          _
        // Predicated region
        $region29: #{tpu_custom_call.1} parent=11 // pred_check
          %p378 = pneg %p158
        $region30: #{tpu_custom_call.1} parent=11 // pred_check_branch
          %380 = sbr.rel (%p378) target = $region32
        $region31: #{tpu_custom_call.1} parent=11 // pred_region
          _
        $region32: #{tpu_custom_call.1} parent=11 // pred_fallthru
          _
        // Predicated region
        $region33: #{tpu_custom_call.1} parent=11 // pred_check
          %p381 = pneg %p179
        $region34: #{tpu_custom_call.1} parent=11 // pred_check_branch
          %383 = sbr.rel (%p381) target = $region36
        $region35: #{tpu_custom_call.1} parent=11 // pred_region
          _
        $region36: #{tpu_custom_call.1} parent=11 // pred_fallthru
          _
        // Predicated region
        $region37: #{tpu_custom_call.1} parent=11 // pred_check
          %p384 = pneg %p200
        $region38: #{tpu_custom_call.1} parent=11 // pred_check_branch
          %386 = sbr.rel (%p384) target = $region40
        $region39: #{tpu_custom_call.1} parent=11 // pred_region
          %s388 = ssub.s32 8192, 8192
          %389 = vsyncadd [#allocation9], %s388
          %s390 = sshll.u32 [#allocation8], 4
          %s391 = int_to_ptr.vmem [resolvable:$true] %s390
          %396 = dma.hbm_to_vmem [thread:$0]  %s7, 8192, %s391, [#allocation9], 512, 512, 32
        $region40: #{tpu_custom_call.1} parent=11 // pred_fallthru
          _
        // Predicated region
        $region41: #{tpu_custom_call.1} parent=11 // pred_check
          %p397 = pneg %p221
        $region42: #{tpu_custom_call.1} parent=11 // pred_check_branch
          %399 = sbr.rel (%p397) target = $region44
        $region43: #{tpu_custom_call.1} parent=11 // pred_region
          _
        $region44: #{tpu_custom_call.1} parent=11 // pred_fallthru
          _
        // Predicated region
        $region45: #{tpu_custom_call.1} parent=11 // pred_check
          %p400 = pneg %p242
        $region46: #{tpu_custom_call.1} parent=11 // pred_check_branch
          %402 = sbr.rel (%p400) target = $region48
        $region47: #{tpu_custom_call.1} parent=11 // pred_region
          %s404 = ssub.s32 8192, 8192
          %405 = vsyncadd [#allocation9], %s404
          %s406 = sshll.u32 [#allocation10], 4
          %s407 = int_to_ptr.vmem [resolvable:$true] %s406
          %412 = dma.hbm_to_vmem [thread:$0]  %s9, 8192, %s407, [#allocation9], 128, 128, 8
        $region48: #{tpu_custom_call.1} parent=11 // pred_fallthru
          _
        // Predicated region
        $region49: #{tpu_custom_call.1} parent=11 // pred_check
          %p413 = pneg %p263
        $region50: #{tpu_custom_call.1} parent=11 // pred_check_branch
          %415 = sbr.rel (%p413) target = $region52
        $region51: #{tpu_custom_call.1} parent=11 // pred_region
          _
        $region52: #{tpu_custom_call.1} parent=11 // pred_fallthru
          _
        // Predicated region
        $region53: #{tpu_custom_call.1} parent=11 // pred_check
          %p416 = pneg %p284
        $region54: #{tpu_custom_call.1} parent=11 // pred_check_branch
          %418 = sbr.rel (%p416) target = $region56
        $region55: #{tpu_custom_call.1} parent=11 // pred_region
          _
        $region56: #{tpu_custom_call.1} parent=11 // pred_fallthru
          _
        // Predicated region
        $region57: #{tpu_custom_call.1} parent=11 // pred_check
          %p419 = pneg %p305
        $region58: #{tpu_custom_call.1} parent=11 // pred_check_branch
          %421 = sbr.rel (%p419) target = $region60
        $region59: #{tpu_custom_call.1} parent=11 // pred_region
          _
        $region60: #{tpu_custom_call.1} parent=11 // pred_fallthru
          _
      $region12: #{tpu_custom_call.1} parent=5 // pred_fallthru
        _
      %p422 = scmp.lt.s32.totalorder %s27, 2
      // Predicated region
      $region61: #{tpu_custom_call.1} parent=5 // pred_check
        %p423 = pneg %p422
      $region62: #{tpu_custom_call.1} parent=5 // pred_check_branch
        %425 = sbr.rel (%p423) target = $region64
      $region63: #{tpu_custom_call.1} parent=5 // pred_region
        // Predicated region
        $region65: #{tpu_custom_call.1} parent=63 // pred_check
          %p426 = pneg %p47
        $region66: #{tpu_custom_call.1} parent=63 // pred_check_branch
          %428 = sbr.rel (%p426) target = $region68
        $region67: #{tpu_custom_call.1} parent=63 // pred_region
          %s429 = sand.u32 %s37, 1
          %s430 = scalar_lea.sflag [#allocation3], %s429
          %s431 = sand.u32 %s37, 1
          %s432 = smul.addr %s431, 8
          %s433 = scalar_lea.vmem [#allocation2], %s432
          %s435 = ssub.s32 128, 128
          %436 = vsyncadd %s430, %s435
          %s437 = smul.addr %s27, 128
          %s438 = scalar_lea.hbm %s0, %s437
          %s440 = sshll.u32 %s433, 4
          %s441 = int_to_ptr.vmem [resolvable:$true] %s440
          %443 = dma.hbm_to_vmem [thread:$0]  %s438, 128, %s441, %s430
        $region68: #{tpu_custom_call.1} parent=63 // pred_fallthru
          _
      $region64: #{tpu_custom_call.1} parent=5 // pred_fallthru
        _
      %p444 = scmp.le.s32.totalorder 1, %s27
      %p445 = scmp.lt.s32.totalorder %s27, 3
      %p446 = pnand %p444, %p445
      %p447 = pneg %p446
      // Predicated region
      $region69: #{tpu_custom_call.1} parent=5 // pred_check
        _
      $region70: #{tpu_custom_call.1} parent=5 // pred_check_branch
        %449 = sbr.rel (%p446) target = $region72
      $region71: #{tpu_custom_call.1} parent=5 // pred_region
        %s450 = ssub.s32 %s27, 1
        %s451 = sand.u32 %s40, 1
        %s452 = scalar_lea.sflag [#allocation3], %s451
        %s453 = sand.u32 %s40, 1
        %s454 = smul.addr %s453, 8
        %s455 = scalar_lea.vmem [#allocation2], %s454
        // Predicated region
        $region73: #{tpu_custom_call.1} parent=71 // pred_check
          %p456 = pneg %p53
        $region74: #{tpu_custom_call.1} parent=71 // pred_check_branch
          %458 = sbr.rel (%p456) target = $region76
        $region75: #{tpu_custom_call.1} parent=71 // pred_region
          %459 = dma.done %s452, 128
        $region76: #{tpu_custom_call.1} parent=71 // pred_fallthru
          _
        // Predicated region
        $region77: #{tpu_custom_call.1} parent=71 // pred_check
          %p460 = pneg %p74
        $region78: #{tpu_custom_call.1} parent=71 // pred_check_branch
          %462 = sbr.rel (%p460) target = $region80
        $region79: #{tpu_custom_call.1} parent=71 // pred_region
          %463 = dma.done [#allocation6], 6144
        $region80: #{tpu_custom_call.1} parent=71 // pred_fallthru
          _
        // Predicated region
        $region81: #{tpu_custom_call.1} parent=71 // pred_check
          %p464 = pneg %p116
        $region82: #{tpu_custom_call.1} parent=71 // pred_check_branch
          %466 = sbr.rel (%p464) target = $region84
        $region83: #{tpu_custom_call.1} parent=71 // pred_region
          %467 = dma.done [#allocation6], 2048
        $region84: #{tpu_custom_call.1} parent=71 // pred_fallthru
          _
        // Predicated region
        $region85: #{tpu_custom_call.1} parent=71 // pred_check
          %p468 = pneg %p200
        $region86: #{tpu_custom_call.1} parent=71 // pred_check_branch
          %470 = sbr.rel (%p468) target = $region88
        $region87: #{tpu_custom_call.1} parent=71 // pred_region
          %471 = dma.done [#allocation9], 8192
        $region88: #{tpu_custom_call.1} parent=71 // pred_fallthru
          _
        // Predicated region
        $region89: #{tpu_custom_call.1} parent=71 // pred_check
          %p472 = pneg %p242
        $region90: #{tpu_custom_call.1} parent=71 // pred_check_branch
          %474 = sbr.rel (%p472) target = $region92
        $region91: #{tpu_custom_call.1} parent=71 // pred_region
          %475 = dma.done [#allocation9], 8192
        $region92: #{tpu_custom_call.1} parent=71 // pred_fallthru
          _
        %s476 = sand.u32 %s40, 1
        %s477 = scalar_lea.sflag [#allocation3], %s476
        %s478 = sand.u32 %s40, 1
        %s479 = smul.addr %s478, 8
        %s480 = scalar_lea.vmem [#allocation2], %s479
        %p481 = pneg %p53
        %p482 = pneg %p50
        %p483 = pneg %p74
        %p484 = pneg %p71
        %p485 = pneg %p95
        %p486 = pneg %p92
        %p487 = pneg %p116
        %p488 = pneg %p113
        %p489 = pneg %p137
        %p490 = pneg %p134
        %p491 = pneg %p158
        %p492 = pneg %p155
        %p493 = pneg %p179
        %p494 = pneg %p176
        %p495 = pneg %p200
        %p496 = pneg %p197
        %p497 = pneg %p221
        %p498 = pneg %p218
        %p499 = pneg %p242
        %p500 = pneg %p239
        %p501 = pneg %p263
        %p502 = pneg %p260
        %p503 = pneg %p284
        %p504 = pneg %p281
        %p505 = pneg %p305
        %p506 = pneg %p302
        %p507 = pneg %p331
        %p508 = pneg %p328
        %s509 = sand.u32 %s318, 1
        %s510 = scalar_lea.sflag [#allocation4], %s509
        %s511 = sand.u32 %s318, 1
        %s512 = smul.addr %s511, 8
        %s513 = scalar_lea.vmem [#allocation11], %s512
        %v514 = vld [vmem:[%s455] sm:$0xff]
        %v515 = vld [vmem:[#allocation5] sm:$0xff]
        %v516 = vld [vmem:[#allocation5 + $0x8] sm:$0xff]
        %v517 = vld [vmem:[#allocation5 + $0x10] sm:$0xff]
        %v518 = vld [vmem:[#allocation5 + $0x18] sm:$0xff]
        %v519 = vld [vmem:[#allocation5 + $0x20] sm:$0xff]
        %v520 = vld [vmem:[#allocation5 + $0x28] sm:$0xff]
        %v521 = vld [vmem:[#allocation5 + $0x30] sm:$0xff]
        %v522 = vld [vmem:[#allocation5 + $0x38] sm:$0xff]
        %v523 = vld [vmem:[#allocation5 + $0x40] sm:$0xff]
        %v524 = vld [vmem:[#allocation5 + $0x48] sm:$0xff]
        %v525 = vld [vmem:[#allocation5 + $0x50] sm:$0xff]
        %v526 = vld [vmem:[#allocation5 + $0x58] sm:$0xff]
        %v527 = vld [vmem:[#allocation5 + $0x60] sm:$0xff]
        %v528 = vld [vmem:[#allocation5 + $0x68] sm:$0xff]
        %v529 = vld [vmem:[#allocation5 + $0x70] sm:$0xff]
        %v530 = vld [vmem:[#allocation5 + $0x78] sm:$0xff]
        %v531 = vld [vmem:[#allocation5 + $0x80] sm:$0xff]
        %v532 = vld [vmem:[#allocation5 + $0x88] sm:$0xff]
        %v533 = vld [vmem:[#allocation5 + $0x90] sm:$0xff]
        %v534 = vld [vmem:[#allocation5 + $0x98] sm:$0xff]
        %v535 = vld [vmem:[#allocation5 + $0xa0] sm:$0xff]
        %v536 = vld [vmem:[#allocation5 + $0xa8] sm:$0xff]
        %v537 = vld [vmem:[#allocation5 + $0xb0] sm:$0xff]
        %v538 = vld [vmem:[#allocation5 + $0xb8] sm:$0xff]
        %v539 = vld [vmem:[#allocation5 + $0xc0] sm:$0xff]
        %v540 = vld [vmem:[#allocation5 + $0xc8] sm:$0xff]
        %v541 = vld [vmem:[#allocation5 + $0xd0] sm:$0xff]
        %v542 = vld [vmem:[#allocation5 + $0xd8] sm:$0xff]
        %v543 = vld [vmem:[#allocation5 + $0xe0] sm:$0xff]
        %v544 = vld [vmem:[#allocation5 + $0xe8] sm:$0xff]
        %v545 = vld [vmem:[#allocation5 + $0xf0] sm:$0xff]
        %v546 = vld [vmem:[#allocation5 + $0xf8] sm:$0xff]
        %v547 = vld [vmem:[#allocation5 + $0x100] sm:$0xff]
        %v548 = vld [vmem:[#allocation5 + $0x108] sm:$0xff]
        %v549 = vld [vmem:[#allocation5 + $0x110] sm:$0xff]
        %v550 = vld [vmem:[#allocation5 + $0x118] sm:$0xff]
        %v551 = vld [vmem:[#allocation5 + $0x120] sm:$0xff]
        %v552 = vld [vmem:[#allocation5 + $0x128] sm:$0xff]
        %v553 = vld [vmem:[#allocation5 + $0x130] sm:$0xff]
        %v554 = vld [vmem:[#allocation5 + $0x138] sm:$0xff]
        %v555 = vld [vmem:[#allocation5 + $0x140] sm:$0xff]
        %v556 = vld [vmem:[#allocation5 + $0x148] sm:$0xff]
        %v557 = vld [vmem:[#allocation5 + $0x150] sm:$0xff]
        %v558 = vld [vmem:[#allocation5 + $0x158] sm:$0xff]
        %v559 = vld [vmem:[#allocation5 + $0x160] sm:$0xff]
        %v560 = vld [vmem:[#allocation5 + $0x168] sm:$0xff]
        %v561 = vld [vmem:[#allocation5 + $0x170] sm:$0xff]
        %v562 = vld [vmem:[#allocation5 + $0x178] sm:$0xff]
        %v563 = vld [vmem:[%s2] sm:$0x7]
        %v565 = vlaneseq
        %v566 = vshrl.u32 %v565, 7
        %v567 = vsub.s32 0, %v566
        %v568 = vrot.slane %v563, %v567
        %v569 = vlaneseq
        %v570 = vshrl.u32 %v569, 7
        %v571 = vsub.s32 1, %v570
        %v572 = vrot.slane %v563, %v571
        %v573 = vlaneseq
        %v574 = vshrl.u32 %v573, 7
        %v575 = vsub.s32 2, %v574
        %v576 = vrot.slane %v563, %v575
        %580 = vmatprep.subr.mxu0 %v516
        %581 = vmatpush1.msra.mxu0 %v515
        %582 = vmatprep.subr.mxu0 %v519
        %583 = vmatpush1.msra.mxu0 %v518
        %584 = vmatprep.subr.mxu0 %v522
        %585 = vmatpush1.msra.mxu0 %v521
        %586 = vmatprep.subr.mxu0 %v525
        %587 = vmatpush1.msra.mxu0 %v524
        %588 = vmatprep.subr.mxu0 %v528
        %589 = vmatpush1.msra.mxu0 %v527
        %590 = vmatprep.subr.mxu0 %v531
        %591 = vmatpush1.msra.mxu0 %v530
        %592 = vmatprep.subr.mxu0 %v534
        %593 = vmatpush1.msra.mxu0 %v533
        %594 = vmatprep.subr.mxu0 %v537
        %595 = vmatpush1.msra.mxu0 %v536
        %596 = vmatprep.subr.mxu0 %v540
        %597 = vmatpush1.msra.mxu0 %v539
        %598 = vmatprep.subr.mxu0 %v543
        %599 = vmatpush1.msra.mxu0 %v542
        %600 = vmatprep.subr.mxu0 %v546
        %601 = vmatpush1.msra.mxu0 %v545
        %602 = vmatprep.subr.mxu0 %v549
        %603 = vmatpush1.msra.mxu0 %v548
        %604 = vmatprep.subr.mxu0 %v552
        %605 = vmatpush1.msra.mxu0 %v551
        %606 = vmatprep.subr.mxu0 %v555
        %607 = vmatpush1.msra.mxu0 %v554
        %608 = vmatprep.subr.mxu0 %v558
        %609 = vmatpush1.msra.mxu0 %v557
        %610 = vmatprep.subr.mxu0 %v561
        %611 = vmatpush1.msra.mxu0 %v560
        %612 = vmatprep.subr.mxu0 0.0
        %613 = vmatpush1.msra.mxu0 0.0
        %614 = vmatprep.subr.mxu0 0.0
        %615 = vmatpush1.msra.mxu0 0.0
        %616 = vmatprep.subr.mxu0 0.0
        %617 = vmatpush1.msra.mxu0 0.0
        %618 = vmatprep.subr.mxu0 0.0
        %619 = vmatpush1.msra.mxu0 0.0
        %620 = vmatprep.subr.mxu0 0.0
        %621 = vmatpush1.msra.mxu0 0.0
        %622 = vmatprep.subr.mxu0 0.0
        %623 = vmatpush1.msra.mxu0 0.0
        %624 = vmatprep.subr.mxu0 0.0
        %625 = vmatpush1.msra.mxu0 0.0
        %626 = vmatprep.subr.mxu0 0.0
        %627 = vmatpush1.msra.mxu0 0.0
        %628 = vmatprep.subr.mxu0 0.0
        %629 = vmatpush1.msra.mxu0 0.0
        %630 = vmatprep.subr.mxu0 0.0
        %631 = vmatpush1.msra.mxu0 0.0
        %632 = vmatprep.subr.mxu0 0.0
        %633 = vmatpush1.msra.mxu0 0.0
        %634 = vmatprep.subr.mxu0 0.0
        %635 = vmatpush1.msra.mxu0 0.0
        %636 = vmatprep.subr.mxu0 0.0
        %637 = vmatpush1.msra.mxu0 0.0
        %638 = vmatprep.subr.mxu0 0.0
        %639 = vmatpush1.msra.mxu0 0.0
        %640 = vmatprep.subr.mxu0 0.0
        %641 = vmatpush1.msra.mxu0 0.0
        %642 = vmatprep.subr.mxu0 0.0
        %643 = vmatpush1.msra.mxu0 0.0
        %644 = vmatprep.mubr.f32.mxu0 0.0
        %645 = vmatmul.mubr.f32.gmra.mrb[0].mxu0 %v514
        %v646 = vpop.f32.mrb[0].mxu0
        %v647 = vadd.f32 %v568, %v646
        %v648 = vpop.f32.mrb[0].mxu0
        %v649 = vadd.f32 %v572, %v648
        %650 = vdwg.mxu0
        %651 = vmatprep.subr.mxu0 0.0
        %652 = vmatpush1.msra.mxu0 %v517
        %653 = vmatprep.subr.mxu0 0.0
        %654 = vmatpush1.msra.mxu0 %v520
        %655 = vmatprep.subr.mxu0 0.0
        %656 = vmatpush1.msra.mxu0 %v523
        %657 = vmatprep.subr.mxu0 0.0
        %658 = vmatpush1.msra.mxu0 %v526
        %659 = vmatprep.subr.mxu0 0.0
        %660 = vmatpush1.msra.mxu0 %v529
        %661 = vmatprep.subr.mxu0 0.0
        %662 = vmatpush1.msra.mxu0 %v532
        %663 = vmatprep.subr.mxu0 0.0
        %664 = vmatpush1.msra.mxu0 %v535
        %665 = vmatprep.subr.mxu0 0.0
        %666 = vmatpush1.msra.mxu0 %v538
        %667 = vmatprep.subr.mxu0 0.0
        %668 = vmatpush1.msra.mxu0 %v541
        %669 = vmatprep.subr.mxu0 0.0
        %670 = vmatpush1.msra.mxu0 %v544
        %671 = vmatprep.subr.mxu0 0.0
        %672 = vmatpush1.msra.mxu0 %v547
        %673 = vmatprep.subr.mxu0 0.0
        %674 = vmatpush1.msra.mxu0 %v550
        %675 = vmatprep.subr.mxu0 0.0
        %676 = vmatpush1.msra.mxu0 %v553
        %677 = vmatprep.subr.mxu0 0.0
        %678 = vmatpush1.msra.mxu0 %v556
        %679 = vmatprep.subr.mxu0 0.0
        %680 = vmatpush1.msra.mxu0 %v559
        %681 = vmatprep.subr.mxu0 0.0
        %682 = vmatpush1.msra.mxu0 %v562
        %683 = vmatprep.subr.mxu0 0.0
        %684 = vmatpush1.msra.mxu0 0.0
        %685 = vmatprep.subr.mxu0 0.0
        %686 = vmatpush1.msra.mxu0 0.0
        %687 = vmatprep.subr.mxu0 0.0
        %688 = vmatpush1.msra.mxu0 0.0
        %689 = vmatprep.subr.mxu0 0.0
        %690 = vmatpush1.msra.mxu0 0.0
        %691 = vmatprep.subr.mxu0 0.0
        %692 = vmatpush1.msra.mxu0 0.0
        %693 = vmatprep.subr.mxu0 0.0
        %694 = vmatpush1.msra.mxu0 0.0
        %695 = vmatprep.subr.mxu0 0.0
        %696 = vmatpush1.msra.mxu0 0.0
        %697 = vmatprep.subr.mxu0 0.0
        %698 = vmatpush1.msra.mxu0 0.0
        %699 = vmatprep.subr.mxu0 0.0
        %700 = vmatpush1.msra.mxu0 0.0
        %701 = vmatprep.subr.mxu0 0.0
        %702 = vmatpush1.msra.mxu0 0.0
        %703 = vmatprep.subr.mxu0 0.0
        %704 = vmatpush1.msra.mxu0 0.0
        %705 = vmatprep.subr.mxu0 0.0
        %706 = vmatpush1.msra.mxu0 0.0
        %707 = vmatprep.subr.mxu0 0.0
        %708 = vmatpush1.msra.mxu0 0.0
        %709 = vmatprep.subr.mxu0 0.0
        %710 = vmatpush1.msra.mxu0 0.0
        %711 = vmatprep.subr.mxu0 0.0
        %712 = vmatpush1.msra.mxu0 0.0
        %713 = vmatprep.subr.mxu0 0.0
        %714 = vmatpush1.msra.mxu0 0.0
        %715 = vmatprep.mubr.f32.mxu0 0.0
        %716 = vmatmul.mubr.f32.gmra.mrb[0].mxu0 %v514
        %v717 = vpop.f32.mrb[0].mxu0
        %v718 = vadd.f32 %v576, %v717
        %v719 = vpop.f32.mrb[0].mxu0
        %720 = vdwg.mxu0
        %v721 = vlaneseq
        %v722 = vshrl.u32 %v721, 7
        %v723 = vlaneseq
        %v724 = vand.u32 %v723, 127
        %vm725 = vcmp.le.s32.totalorder %v724, %v722
        %vm726 = vcmask 261120
        %v728 = vsel %vm726, %v647, 0
        %v731 = vsel %vm726, %v649, 0
        %733 = vmatprep.subr.mxu0 0.0
        %734 = vmatpush1.xpose.msra.mxu0 %v731
        %735 = vmatprep.subr.mxu0 0.0
        %736 = vmatpush1.xpose.msra.mxu0 0.0
        %737 = vmatprep.subr.mxu0 0.0
        %738 = vmatpush1.xpose.msra.mxu0 0.0
        %739 = vmatprep.subr.mxu0 0.0
        %740 = vmatpush1.xpose.msra.mxu0 0.0
        %741 = vmatprep.subr.mxu0 0.0
        %742 = vmatpush1.xpose.msra.mxu0 0.0
        %743 = vmatprep.subr.mxu0 0.0
        %744 = vmatpush1.xpose.msra.mxu0 0.0
        %745 = vmatprep.subr.mxu0 0.0
        %746 = vmatpush1.xpose.msra.mxu0 0.0
        %747 = vmatprep.subr.mxu0 0.0
        %748 = vmatpush1.xpose.msra.mxu0 0.0
        %749 = vmatprep.subr.mxu0 0.0
        %750 = vmatpush1.xpose.msra.mxu0 0.0
        %751 = vmatprep.subr.mxu0 0.0
        %752 = vmatpush1.xpose.msra.mxu0 0.0
        %753 = vmatprep.subr.mxu0 0.0
        %754 = vmatpush1.xpose.msra.mxu0 0.0
        %755 = vmatprep.subr.mxu0 0.0
        %756 = vmatpush1.xpose.msra.mxu0 0.0
        %757 = vmatprep.subr.mxu0 0.0
        %758 = vmatpush1.xpose.msra.mxu0 0.0
        %759 = vmatprep.subr.mxu0 0.0
        %760 = vmatpush1.xpose.msra.mxu0 0.0
        %761 = vmatprep.subr.mxu0 0.0
        %762 = vmatpush1.xpose.msra.mxu0 0.0
        %763 = vmatprep.subr.mxu0 0.0
        %764 = vmatpush1.xpose.msra.mxu0 0.0
        %765 = vmatprep.subr.mxu0 0.0
        %766 = vmatpush1.xpose.msra.mxu0 0.0
        %767 = vmatprep.subr.mxu0 0.0
        %768 = vmatpush1.xpose.msra.mxu0 0.0
        %769 = vmatprep.subr.mxu0 0.0
        %770 = vmatpush1.xpose.msra.mxu0 0.0
        %771 = vmatprep.subr.mxu0 0.0
        %772 = vmatpush1.xpose.msra.mxu0 0.0
        %773 = vmatprep.subr.mxu0 0.0
        %774 = vmatpush1.xpose.msra.mxu0 0.0
        %775 = vmatprep.subr.mxu0 0.0
        %776 = vmatpush1.xpose.msra.mxu0 0.0
        %777 = vmatprep.subr.mxu0 0.0
        %778 = vmatpush1.xpose.msra.mxu0 0.0
        %779 = vmatprep.subr.mxu0 0.0
        %780 = vmatpush1.xpose.msra.mxu0 0.0
        %781 = vmatprep.subr.mxu0 0.0
        %782 = vmatpush1.xpose.msra.mxu0 0.0
        %783 = vmatprep.subr.mxu0 0.0
        %784 = vmatpush1.xpose.msra.mxu0 0.0
        %785 = vmatprep.subr.mxu0 0.0
        %786 = vmatpush1.xpose.msra.mxu0 0.0
        %787 = vmatprep.subr.mxu0 0.0
        %788 = vmatpush1.xpose.msra.mxu0 0.0
        %789 = vmatprep.subr.mxu0 0.0
        %790 = vmatpush1.xpose.msra.mxu0 0.0
        %791 = vmatprep.subr.mxu0 0.0
        %792 = vmatpush1.xpose.msra.mxu0 0.0
        %793 = vmatprep.subr.mxu0 0.0
        %794 = vmatpush1.xpose.msra.mxu0 0.0
        %795 = vmatprep.subr.mxu0 0.0
        %796 = vmatpush1.xpose.msra.mxu0 0.0
        %797 = vmatprep.mubr.f32.mxu0 0.0
        %798 = vmatmul.mubr.f32.gmra.mrb[0].mxu0 %v728
        %v799 = vpop.f32.mrb[0].mxu0
        %v800 = vadd.f32 0.0, %v799
        %v801 = vpop.f32.mrb[0].mxu0
        %802 = vdwg.mxu0
        %v803 = vmul.f32 %v800, 0.17677669
        %v804 = vsel %vm725, %v803, -inf
        %vm805 = vcmask 64512
        %v806 = vsel %vm805, %v804, -inf
        %807 = vmax.xlane.f32.xlu0 %v806
        %v808 = vpop.xlane.xlu0 %807
        %v809 = vsub.f32 %v804, %v808
        %v810 = vmul.f32 %v809, 1.442695
        %v811 = vpow.pop %v810
        %v812 = vsel %vm805, %v811, 0.0
        %813 = vadd.xlane.f32.xlu0 %v812
        %v814 = vpop.xlane.xlu0 %813
        %v815 = vrcp.pop %v814
        %v816 = vmul.f32 %v811, %v815
        %v818 = vsel %vm805, %v816, 0
        %820 = vmatprep.subr.mxu0 0.0
        %821 = vmatpush1.msra.mxu0 %v718
        %822 = vmatprep.subr.mxu0 0.0
        %823 = vmatpush1.msra.mxu0 0.0
        %824 = vmatprep.subr.mxu0 0.0
        %825 = vmatpush1.msra.mxu0 0.0
        %826 = vmatprep.subr.mxu0 0.0
        %827 = vmatpush1.msra.mxu0 0.0
        %828 = vmatprep.subr.mxu0 0.0
        %829 = vmatpush1.msra.mxu0 0.0
        %830 = vmatprep.subr.mxu0 0.0
        %831 = vmatpush1.msra.mxu0 0.0
        %832 = vmatprep.subr.mxu0 0.0
        %833 = vmatpush1.msra.mxu0 0.0
        %834 = vmatprep.subr.mxu0 0.0
        %835 = vmatpush1.msra.mxu0 0.0
        %836 = vmatprep.subr.mxu0 0.0
        %837 = vmatpush1.msra.mxu0 0.0
        %838 = vmatprep.subr.mxu0 0.0
        %839 = vmatpush1.msra.mxu0 0.0
        %840 = vmatprep.subr.mxu0 0.0
        %841 = vmatpush1.msra.mxu0 0.0
        %842 = vmatprep.subr.mxu0 0.0
        %843 = vmatpush1.msra.mxu0 0.0
        %844 = vmatprep.subr.mxu0 0.0
        %845 = vmatpush1.msra.mxu0 0.0
        %846 = vmatprep.subr.mxu0 0.0
        %847 = vmatpush1.msra.mxu0 0.0
        %848 = vmatprep.subr.mxu0 0.0
        %849 = vmatpush1.msra.mxu0 0.0
        %850 = vmatprep.subr.mxu0 0.0
        %851 = vmatpush1.msra.mxu0 0.0
        %852 = vmatprep.subr.mxu0 0.0
        %853 = vmatpush1.msra.mxu0 0.0
        %854 = vmatprep.subr.mxu0 0.0
        %855 = vmatpush1.msra.mxu0 0.0
        %856 = vmatprep.subr.mxu0 0.0
        %857 = vmatpush1.msra.mxu0 0.0
        %858 = vmatprep.subr.mxu0 0.0
        %859 = vmatpush1.msra.mxu0 0.0
        %860 = vmatprep.subr.mxu0 0.0
        %861 = vmatpush1.msra.mxu0 0.0
        %862 = vmatprep.subr.mxu0 0.0
        %863 = vmatpush1.msra.mxu0 0.0
        %864 = vmatprep.subr.mxu0 0.0
        %865 = vmatpush1.msra.mxu0 0.0
        %866 = vmatprep.subr.mxu0 0.0
        %867 = vmatpush1.msra.mxu0 0.0
        %868 = vmatprep.subr.mxu0 0.0
        %869 = vmatpush1.msra.mxu0 0.0
        %870 = vmatprep.subr.mxu0 0.0
        %871 = vmatpush1.msra.mxu0 0.0
        %872 = vmatprep.subr.mxu0 0.0
        %873 = vmatpush1.msra.mxu0 0.0
        %874 = vmatprep.subr.mxu0 0.0
        %875 = vmatpush1.msra.mxu0 0.0
        %876 = vmatprep.subr.mxu0 0.0
        %877 = vmatpush1.msra.mxu0 0.0
        %878 = vmatprep.subr.mxu0 0.0
        %879 = vmatpush1.msra.mxu0 0.0
        %880 = vmatprep.subr.mxu0 0.0
        %881 = vmatpush1.msra.mxu0 0.0
        %882 = vmatprep.subr.mxu0 0.0
        %883 = vmatpush1.msra.mxu0 0.0
        %884 = vmatprep.mubr.f32.mxu0 0.0
        %885 = vmatmul.mubr.f32.gmra.mrb[0].mxu0 %v818
        %v886 = vpop.f32.mrb[0].mxu0
        %v887 = vadd.f32 0.0, %v886
        %v888 = vpop.f32.mrb[0].mxu0
        %889 = vdwg.mxu0
        %890 = vrot.lane.b32.xlu0 %v647, 96
        %v891 = vpop.permute.xlu0 %890
        %892 = vrot.lane.b32.xlu0 %v649, 96
        %v893 = vpop.permute.xlu0 %892
        %v894 = vsel %vm726, %v891, 0
        %v896 = vsel %vm726, %v893, 0
        %898 = vmatprep.subr.mxu0 0.0
        %899 = vmatpush1.xpose.msra.mxu0 %v896
        %900 = vmatprep.subr.mxu0 0.0
        %901 = vmatpush1.xpose.msra.mxu0 0.0
        %902 = vmatprep.subr.mxu0 0.0
        %903 = vmatpush1.xpose.msra.mxu0 0.0
        %904 = vmatprep.subr.mxu0 0.0
        %905 = vmatpush1.xpose.msra.mxu0 0.0
        %906 = vmatprep.subr.mxu0 0.0
        %907 = vmatpush1.xpose.msra.mxu0 0.0
        %908 = vmatprep.subr.mxu0 0.0
        %909 = vmatpush1.xpose.msra.mxu0 0.0
        %910 = vmatprep.subr.mxu0 0.0
        %911 = vmatpush1.xpose.msra.mxu0 0.0
        %912 = vmatprep.subr.mxu0 0.0
        %913 = vmatpush1.xpose.msra.mxu0 0.0
        %914 = vmatprep.subr.mxu0 0.0
        %915 = vmatpush1.xpose.msra.mxu0 0.0
        %916 = vmatprep.subr.mxu0 0.0
        %917 = vmatpush1.xpose.msra.mxu0 0.0
        %918 = vmatprep.subr.mxu0 0.0
        %919 = vmatpush1.xpose.msra.mxu0 0.0
        %920 = vmatprep.subr.mxu0 0.0
        %921 = vmatpush1.xpose.msra.mxu0 0.0
        %922 = vmatprep.subr.mxu0 0.0
        %923 = vmatpush1.xpose.msra.mxu0 0.0
        %924 = vmatprep.subr.mxu0 0.0
        %925 = vmatpush1.xpose.msra.mxu0 0.0
        %926 = vmatprep.subr.mxu0 0.0
        %927 = vmatpush1.xpose.msra.mxu0 0.0
        %928 = vmatprep.subr.mxu0 0.0
        %929 = vmatpush1.xpose.msra.mxu0 0.0
        %930 = vmatprep.subr.mxu0 0.0
        %931 = vmatpush1.xpose.msra.mxu0 0.0
        %932 = vmatprep.subr.mxu0 0.0
        %933 = vmatpush1.xpose.msra.mxu0 0.0
        %934 = vmatprep.subr.mxu0 0.0
        %935 = vmatpush1.xpose.msra.mxu0 0.0
        %936 = vmatprep.subr.mxu0 0.0
        %937 = vmatpush1.xpose.msra.mxu0 0.0
        %938 = vmatprep.subr.mxu0 0.0
        %939 = vmatpush1.xpose.msra.mxu0 0.0
        %940 = vmatprep.subr.mxu0 0.0
        %941 = vmatpush1.xpose.msra.mxu0 0.0
        %942 = vmatprep.subr.mxu0 0.0
        %943 = vmatpush1.xpose.msra.mxu0 0.0
        %944 = vmatprep.subr.mxu0 0.0
        %945 = vmatpush1.xpose.msra.mxu0 0.0
        %946 = vmatprep.subr.mxu0 0.0
        %947 = vmatpush1.xpose.msra.mxu0 0.0
        %948 = vmatprep.subr.mxu0 0.0
        %949 = vmatpush1.xpose.msra.mxu0 0.0
        %950 = vmatprep.subr.mxu0 0.0
        %951 = vmatpush1.xpose.msra.mxu0 0.0
        %952 = vmatprep.subr.mxu0 0.0
        %953 = vmatpush1.xpose.msra.mxu0 0.0
        %954 = vmatprep.subr.mxu0 0.0
        %955 = vmatpush1.xpose.msra.mxu0 0.0
        %956 = vmatprep.subr.mxu0 0.0
        %957 = vmatpush1.xpose.msra.mxu0 0.0
        %958 = vmatprep.subr.mxu0 0.0
        %959 = vmatpush1.xpose.msra.mxu0 0.0
        %960 = vmatprep.subr.mxu0 0.0
        %961 = vmatpush1.xpose.msra.mxu0 0.0
        %962 = vmatprep.mubr.f32.mxu0 0.0
        %963 = vmatmul.mubr.f32.gmra.mrb[0].mxu0 %v894
        %v964 = vpop.f32.mrb[0].mxu0
        %v965 = vadd.f32 0.0, %v964
        %v966 = vpop.f32.mrb[0].mxu0
        %967 = vdwg.mxu0
        %v968 = vmul.f32 %v965, 0.17677669
        %v969 = vsel %vm725, %v968, -inf
        %v970 = vsel %vm805, %v969, -inf
        %971 = vmax.xlane.f32.xlu0 %v970
        %v972 = vpop.xlane.xlu0 %971
        %v973 = vsub.f32 %v969, %v972
        %v974 = vmul.f32 %v973, 1.442695
        %v975 = vpow.pop %v974
        %v976 = vsel %vm805, %v975, 0.0
        %977 = vadd.xlane.f32.xlu0 %v976
        %v978 = vpop.xlane.xlu0 %977
        %v979 = vrcp.pop %v978
        %v980 = vmul.f32 %v975, %v979
        %982 = vrot.lane.b32.xlu0 %v718, 96
        %v983 = vpop.permute.xlu0 %982
        %v986 = vsel %vm805, %v980, 0
        %988 = vmatprep.subr.mxu0 0.0
        %989 = vmatpush1.msra.mxu0 %v983
        %990 = vmatprep.subr.mxu0 0.0
        %991 = vmatpush1.msra.mxu0 0.0
        %992 = vmatprep.subr.mxu0 0.0
        %993 = vmatpush1.msra.mxu0 0.0
        %994 = vmatprep.subr.mxu0 0.0
        %995 = vmatpush1.msra.mxu0 0.0
        %996 = vmatprep.subr.mxu0 0.0
        %997 = vmatpush1.msra.mxu0 0.0
        %998 = vmatprep.subr.mxu0 0.0
        %999 = vmatpush1.msra.mxu0 0.0
        %1000 = vmatprep.subr.mxu0 0.0
        %1001 = vmatpush1.msra.mxu0 0.0
        %1002 = vmatprep.subr.mxu0 0.0
        %1003 = vmatpush1.msra.mxu0 0.0
        %1004 = vmatprep.subr.mxu0 0.0
        %1005 = vmatpush1.msra.mxu0 0.0
        %1006 = vmatprep.subr.mxu0 0.0
        %1007 = vmatpush1.msra.mxu0 0.0
        %1008 = vmatprep.subr.mxu0 0.0
        %1009 = vmatpush1.msra.mxu0 0.0
        %1010 = vmatprep.subr.mxu0 0.0
        %1011 = vmatpush1.msra.mxu0 0.0
        %1012 = vmatprep.subr.mxu0 0.0
        %1013 = vmatpush1.msra.mxu0 0.0
        %1014 = vmatprep.subr.mxu0 0.0
        %1015 = vmatpush1.msra.mxu0 0.0
        %1016 = vmatprep.subr.mxu0 0.0
        %1017 = vmatpush1.msra.mxu0 0.0
        %1018 = vmatprep.subr.mxu0 0.0
        %1019 = vmatpush1.msra.mxu0 0.0
        %1020 = vmatprep.subr.mxu0 0.0
        %1021 = vmatpush1.msra.mxu0 0.0
        %1022 = vmatprep.subr.mxu0 0.0
        %1023 = vmatpush1.msra.mxu0 0.0
        %1024 = vmatprep.subr.mxu0 0.0
        %1025 = vmatpush1.msra.mxu0 0.0
        %1026 = vmatprep.subr.mxu0 0.0
        %1027 = vmatpush1.msra.mxu0 0.0
        %1028 = vmatprep.subr.mxu0 0.0
        %1029 = vmatpush1.msra.mxu0 0.0
        %1030 = vmatprep.subr.mxu0 0.0
        %1031 = vmatpush1.msra.mxu0 0.0
        %1032 = vmatprep.subr.mxu0 0.0
        %1033 = vmatpush1.msra.mxu0 0.0
        %1034 = vmatprep.subr.mxu0 0.0
        %1035 = vmatpush1.msra.mxu0 0.0
        %1036 = vmatprep.subr.mxu0 0.0
        %1037 = vmatpush1.msra.mxu0 0.0
        %1038 = vmatprep.subr.mxu0 0.0
        %1039 = vmatpush1.msra.mxu0 0.0
        %1040 = vmatprep.subr.mxu0 0.0
        %1041 = vmatpush1.msra.mxu0 0.0
        %1042 = vmatprep.subr.mxu0 0.0
        %1043 = vmatpush1.msra.mxu0 0.0
        %1044 = vmatprep.subr.mxu0 0.0
        %1045 = vmatpush1.msra.mxu0 0.0
        %1046 = vmatprep.subr.mxu0 0.0
        %1047 = vmatpush1.msra.mxu0 0.0
        %1048 = vmatprep.subr.mxu0 0.0
        %1049 = vmatpush1.msra.mxu0 0.0
        %1050 = vmatprep.subr.mxu0 0.0
        %1051 = vmatpush1.msra.mxu0 0.0
        %1052 = vmatprep.mubr.f32.mxu0 0.0
        %1053 = vmatmul.mubr.f32.gmra.mrb[0].mxu0 %v986
        %v1054 = vpop.f32.mrb[0].mxu0
        %v1055 = vadd.f32 0.0, %v1054
        %v1056 = vpop.f32.mrb[0].mxu0
        %1057 = vdwg.mxu0
        %1058 = vrot.lane.b32.xlu0 %v647, 64
        %v1059 = vpop.permute.xlu0 %1058
        %1060 = vrot.lane.b32.xlu0 %v649, 64
        %v1061 = vpop.permute.xlu0 %1060
        %v1062 = vsel %vm726, %v1059, 0
        %v1064 = vsel %vm726, %v1061, 0
        %1066 = vmatprep.subr.mxu0 0.0
        %1067 = vmatpush1.xpose.msra.mxu0 %v1064
        %1068 = vmatprep.subr.mxu0 0.0
        %1069 = vmatpush1.xpose.msra.mxu0 0.0
        %1070 = vmatprep.subr.mxu0 0.0
        %1071 = vmatpush1.xpose.msra.mxu0 0.0
        %1072 = vmatprep.subr.mxu0 0.0
        %1073 = vmatpush1.xpose.msra.mxu0 0.0
        %1074 = vmatprep.subr.mxu0 0.0
        %1075 = vmatpush1.xpose.msra.mxu0 0.0
        %1076 = vmatprep.subr.mxu0 0.0
        %1077 = vmatpush1.xpose.msra.mxu0 0.0
        %1078 = vmatprep.subr.mxu0 0.0
        %1079 = vmatpush1.xpose.msra.mxu0 0.0
        %1080 = vmatprep.subr.mxu0 0.0
        %1081 = vmatpush1.xpose.msra.mxu0 0.0
        %1082 = vmatprep.subr.mxu0 0.0
        %1083 = vmatpush1.xpose.msra.mxu0 0.0
        %1084 = vmatprep.subr.mxu0 0.0
        %1085 = vmatpush1.xpose.msra.mxu0 0.0
        %1086 = vmatprep.subr.mxu0 0.0
        %1087 = vmatpush1.xpose.msra.mxu0 0.0
        %1088 = vmatprep.subr.mxu0 0.0
        %1089 = vmatpush1.xpose.msra.mxu0 0.0
        %1090 = vmatprep.subr.mxu0 0.0
        %1091 = vmatpush1.xpose.msra.mxu0 0.0
        %1092 = vmatprep.subr.mxu0 0.0
        %1093 = vmatpush1.xpose.msra.mxu0 0.0
        %1094 = vmatprep.subr.mxu0 0.0
        %1095 = vmatpush1.xpose.msra.mxu0 0.0
        %1096 = vmatprep.subr.mxu0 0.0
        %1097 = vmatpush1.xpose.msra.mxu0 0.0
        %1098 = vmatprep.subr.mxu0 0.0
        %1099 = vmatpush1.xpose.msra.mxu0 0.0
        %1100 = vmatprep.subr.mxu0 0.0
        %1101 = vmatpush1.xpose.msra.mxu0 0.0
        %1102 = vmatprep.subr.mxu0 0.0
        %1103 = vmatpush1.xpose.msra.mxu0 0.0
        %1104 = vmatprep.subr.mxu0 0.0
        %1105 = vmatpush1.xpose.msra.mxu0 0.0
        %1106 = vmatprep.subr.mxu0 0.0
        %1107 = vmatpush1.xpose.msra.mxu0 0.0
        %1108 = vmatprep.subr.mxu0 0.0
        %1109 = vmatpush1.xpose.msra.mxu0 0.0
        %1110 = vmatprep.subr.mxu0 0.0
        %1111 = vmatpush1.xpose.msra.mxu0 0.0
        %1112 = vmatprep.subr.mxu0 0.0
        %1113 = vmatpush1.xpose.msra.mxu0 0.0
        %1114 = vmatprep.subr.mxu0 0.0
        %1115 = vmatpush1.xpose.msra.mxu0 0.0
        %1116 = vmatprep.subr.mxu0 0.0
        %1117 = vmatpush1.xpose.msra.mxu0 0.0
        %1118 = vmatprep.subr.mxu0 0.0
        %1119 = vmatpush1.xpose.msra.mxu0 0.0
        %1120 = vmatprep.subr.mxu0 0.0
        %1121 = vmatpush1.xpose.msra.mxu0 0.0
        %1122 = vmatprep.subr.mxu0 0.0
        %1123 = vmatpush1.xpose.msra.mxu0 0.0
        %1124 = vmatprep.subr.mxu0 0.0
        %1125 = vmatpush1.xpose.msra.mxu0 0.0
        %1126 = vmatprep.subr.mxu0 0.0
        %1127 = vmatpush1.xpose.msra.mxu0 0.0
        %1128 = vmatprep.subr.mxu0 0.0
        %1129 = vmatpush1.xpose.msra.mxu0 0.0
        %1130 = vmatprep.mubr.f32.mxu0 0.0
        %1131 = vmatmul.mubr.f32.gmra.mrb[0].mxu0 %v1062
        %v1132 = vpop.f32.mrb[0].mxu0
        %v1133 = vadd.f32 0.0, %v1132
        %v1134 = vpop.f32.mrb[0].mxu0
        %1135 = vdwg.mxu0
        %v1136 = vmul.f32 %v1133, 0.17677669
        %v1137 = vsel %vm725, %v1136, -inf
        %v1138 = vsel %vm805, %v1137, -inf
        %1139 = vmax.xlane.f32.xlu0 %v1138
        %v1140 = vpop.xlane.xlu0 %1139
        %v1141 = vsub.f32 %v1137, %v1140
        %v1142 = vmul.f32 %v1141, 1.442695
        %v1143 = vpow.pop %v1142
        %v1144 = vsel %vm805, %v1143, 0.0
        %1145 = vadd.xlane.f32.xlu0 %v1144
        %v1146 = vpop.xlane.xlu0 %1145
        %v1147 = vrcp.pop %v1146
        %v1148 = vmul.f32 %v1143, %v1147
        %1149 = vrot.lane.b32.xlu0 %v718, 64
        %v1150 = vpop.permute.xlu0 %1149
        %v1153 = vsel %vm805, %v1148, 0
        %1155 = vmatprep.subr.mxu0 0.0
        %1156 = vmatpush1.msra.mxu0 %v1150
        %1157 = vmatprep.subr.mxu0 0.0
        %1158 = vmatpush1.msra.mxu0 0.0
        %1159 = vmatprep.subr.mxu0 0.0
        %1160 = vmatpush1.msra.mxu0 0.0
        %1161 = vmatprep.subr.mxu0 0.0
        %1162 = vmatpush1.msra.mxu0 0.0
        %1163 = vmatprep.subr.mxu0 0.0
        %1164 = vmatpush1.msra.mxu0 0.0
        %1165 = vmatprep.subr.mxu0 0.0
        %1166 = vmatpush1.msra.mxu0 0.0
        %1167 = vmatprep.subr.mxu0 0.0
        %1168 = vmatpush1.msra.mxu0 0.0
        %1169 = vmatprep.subr.mxu0 0.0
        %1170 = vmatpush1.msra.mxu0 0.0
        %1171 = vmatprep.subr.mxu0 0.0
        %1172 = vmatpush1.msra.mxu0 0.0
        %1173 = vmatprep.subr.mxu0 0.0
        %1174 = vmatpush1.msra.mxu0 0.0
        %1175 = vmatprep.subr.mxu0 0.0
        %1176 = vmatpush1.msra.mxu0 0.0
        %1177 = vmatprep.subr.mxu0 0.0
        %1178 = vmatpush1.msra.mxu0 0.0
        %1179 = vmatprep.subr.mxu0 0.0
        %1180 = vmatpush1.msra.mxu0 0.0
        %1181 = vmatprep.subr.mxu0 0.0
        %1182 = vmatpush1.msra.mxu0 0.0
        %1183 = vmatprep.subr.mxu0 0.0
        %1184 = vmatpush1.msra.mxu0 0.0
        %1185 = vmatprep.subr.mxu0 0.0
        %1186 = vmatpush1.msra.mxu0 0.0
        %1187 = vmatprep.subr.mxu0 0.0
        %1188 = vmatpush1.msra.mxu0 0.0
        %1189 = vmatprep.subr.mxu0 0.0
        %1190 = vmatpush1.msra.mxu0 0.0
        %1191 = vmatprep.subr.mxu0 0.0
        %1192 = vmatpush1.msra.mxu0 0.0
        %1193 = vmatprep.subr.mxu0 0.0
        %1194 = vmatpush1.msra.mxu0 0.0
        %1195 = vmatprep.subr.mxu0 0.0
        %1196 = vmatpush1.msra.mxu0 0.0
        %1197 = vmatprep.subr.mxu0 0.0
        %1198 = vmatpush1.msra.mxu0 0.0
        %1199 = vmatprep.subr.mxu0 0.0
        %1200 = vmatpush1.msra.mxu0 0.0
        %1201 = vmatprep.subr.mxu0 0.0
        %1202 = vmatpush1.msra.mxu0 0.0
        %1203 = vmatprep.subr.mxu0 0.0
        %1204 = vmatpush1.msra.mxu0 0.0
        %1205 = vmatprep.subr.mxu0 0.0
        %1206 = vmatpush1.msra.mxu0 0.0
        %1207 = vmatprep.subr.mxu0 0.0
        %1208 = vmatpush1.msra.mxu0 0.0
        %1209 = vmatprep.subr.mxu0 0.0
        %1210 = vmatpush1.msra.mxu0 0.0
        %1211 = vmatprep.subr.mxu0 0.0
        %1212 = vmatpush1.msra.mxu0 0.0
        %1213 = vmatprep.subr.mxu0 0.0
        %1214 = vmatpush1.msra.mxu0 0.0
        %1215 = vmatprep.subr.mxu0 0.0
        %1216 = vmatpush1.msra.mxu0 0.0
        %1217 = vmatprep.subr.mxu0 0.0
        %1218 = vmatpush1.msra.mxu0 0.0
        %1219 = vmatprep.mubr.f32.mxu0 0.0
        %1220 = vmatmul.mubr.f32.gmra.mrb[0].mxu0 %v1153
        %v1221 = vpop.f32.mrb[0].mxu0
        %v1222 = vadd.f32 0.0, %v1221
        %v1223 = vpop.f32.mrb[0].mxu0
        %1224 = vdwg.mxu0
        %1225 = vrot.lane.b32.xlu0 %v647, 32
        %v1226 = vpop.permute.xlu0 %1225
        %1227 = vrot.lane.b32.xlu0 %v649, 32
        %v1228 = vpop.permute.xlu0 %1227
        %v1229 = vsel %vm726, %v1226, 0
        %v1231 = vsel %vm726, %v1228, 0
        %1233 = vmatprep.subr.mxu0 0.0
        %1234 = vmatpush1.xpose.msra.mxu0 %v1231
        %1235 = vmatprep.subr.mxu0 0.0
        %1236 = vmatpush1.xpose.msra.mxu0 0.0
        %1237 = vmatprep.subr.mxu0 0.0
        %1238 = vmatpush1.xpose.msra.mxu0 0.0
        %1239 = vmatprep.subr.mxu0 0.0
        %1240 = vmatpush1.xpose.msra.mxu0 0.0
        %1241 = vmatprep.subr.mxu0 0.0
        %1242 = vmatpush1.xpose.msra.mxu0 0.0
        %1243 = vmatprep.subr.mxu0 0.0
        %1244 = vmatpush1.xpose.msra.mxu0 0.0
        %1245 = vmatprep.subr.mxu0 0.0
        %1246 = vmatpush1.xpose.msra.mxu0 0.0
        %1247 = vmatprep.subr.mxu0 0.0
        %1248 = vmatpush1.xpose.msra.mxu0 0.0
        %1249 = vmatprep.subr.mxu0 0.0
        %1250 = vmatpush1.xpose.msra.mxu0 0.0
        %1251 = vmatprep.subr.mxu0 0.0
        %1252 = vmatpush1.xpose.msra.mxu0 0.0
        %1253 = vmatprep.subr.mxu0 0.0
        %1254 = vmatpush1.xpose.msra.mxu0 0.0
        %1255 = vmatprep.subr.mxu0 0.0
        %1256 = vmatpush1.xpose.msra.mxu0 0.0
        %1257 = vmatprep.subr.mxu0 0.0
        %1258 = vmatpush1.xpose.msra.mxu0 0.0
        %1259 = vmatprep.subr.mxu0 0.0
        %1260 = vmatpush1.xpose.msra.mxu0 0.0
        %1261 = vmatprep.subr.mxu0 0.0
        %1262 = vmatpush1.xpose.msra.mxu0 0.0
        %1263 = vmatprep.subr.mxu0 0.0
        %1264 = vmatpush1.xpose.msra.mxu0 0.0
        %1265 = vmatprep.subr.mxu0 0.0
        %1266 = vmatpush1.xpose.msra.mxu0 0.0
        %1267 = vmatprep.subr.mxu0 0.0
        %1268 = vmatpush1.xpose.msra.mxu0 0.0
        %1269 = vmatprep.subr.mxu0 0.0
        %1270 = vmatpush1.xpose.msra.mxu0 0.0
        %1271 = vmatprep.subr.mxu0 0.0
        %1272 = vmatpush1.xpose.msra.mxu0 0.0
        %1273 = vmatprep.subr.mxu0 0.0
        %1274 = vmatpush1.xpose.msra.mxu0 0.0
        %1275 = vmatprep.subr.mxu0 0.0
        %1276 = vmatpush1.xpose.msra.mxu0 0.0
        %1277 = vmatprep.subr.mxu0 0.0
        %1278 = vmatpush1.xpose.msra.mxu0 0.0
        %1279 = vmatprep.subr.mxu0 0.0
        %1280 = vmatpush1.xpose.msra.mxu0 0.0
        %1281 = vmatprep.subr.mxu0 0.0
        %1282 = vmatpush1.xpose.msra.mxu0 0.0
        %1283 = vmatprep.subr.mxu0 0.0
        %1284 = vmatpush1.xpose.msra.mxu0 0.0
        %1285 = vmatprep.subr.mxu0 0.0
        %1286 = vmatpush1.xpose.msra.mxu0 0.0
        %1287 = vmatprep.subr.mxu0 0.0
        %1288 = vmatpush1.xpose.msra.mxu0 0.0
        %1289 = vmatprep.subr.mxu0 0.0
        %1290 = vmatpush1.xpose.msra.mxu0 0.0
        %1291 = vmatprep.subr.mxu0 0.0
        %1292 = vmatpush1.xpose.msra.mxu0 0.0
        %1293 = vmatprep.subr.mxu0 0.0
        %1294 = vmatpush1.xpose.msra.mxu0 0.0
        %1295 = vmatprep.subr.mxu0 0.0
        %1296 = vmatpush1.xpose.msra.mxu0 0.0
        %1297 = vmatprep.mubr.f32.mxu0 0.0
        %1298 = vmatmul.mubr.f32.gmra.mrb[0].mxu0 %v1229
        %v1299 = vpop.f32.mrb[0].mxu0
        %v1300 = vadd.f32 0.0, %v1299
        %v1301 = vpop.f32.mrb[0].mxu0
        %1302 = vdwg.mxu0
        %v1303 = vmul.f32 %v1300, 0.17677669
        %v1304 = vsel %vm725, %v1303, -inf
        %v1305 = vsel %vm805, %v1304, -inf
        %1306 = vmax.xlane.f32.xlu0 %v1305
        %v1307 = vpop.xlane.xlu0 %1306
        %v1308 = vsub.f32 %v1304, %v1307
        %v1309 = vmul.f32 %v1308, 1.442695
        %v1310 = vpow.pop %v1309
        %v1311 = vsel %vm805, %v1310, 0.0
        %1312 = vadd.xlane.f32.xlu0 %v1311
        %v1313 = vpop.xlane.xlu0 %1312
        %v1314 = vrcp.pop %v1313
        %v1315 = vmul.f32 %v1310, %v1314
        %1316 = vrot.lane.b32.xlu0 %v718, 32
        %v1317 = vpop.permute.xlu0 %1316
        %v1320 = vsel %vm805, %v1315, 0
        %1322 = vmatprep.subr.mxu0 0.0
        %1323 = vmatpush1.msra.mxu0 %v1317
        %1324 = vmatprep.subr.mxu0 0.0
        %1325 = vmatpush1.msra.mxu0 0.0
        %1326 = vmatprep.subr.mxu0 0.0
        %1327 = vmatpush1.msra.mxu0 0.0
        %1328 = vmatprep.subr.mxu0 0.0
        %1329 = vmatpush1.msra.mxu0 0.0
        %1330 = vmatprep.subr.mxu0 0.0
        %1331 = vmatpush1.msra.mxu0 0.0
        %1332 = vmatprep.subr.mxu0 0.0
        %1333 = vmatpush1.msra.mxu0 0.0
        %1334 = vmatprep.subr.mxu0 0.0
        %1335 = vmatpush1.msra.mxu0 0.0
        %1336 = vmatprep.subr.mxu0 0.0
        %1337 = vmatpush1.msra.mxu0 0.0
        %1338 = vmatprep.subr.mxu0 0.0
        %1339 = vmatpush1.msra.mxu0 0.0
        %1340 = vmatprep.subr.mxu0 0.0
        %1341 = vmatpush1.msra.mxu0 0.0
        %1342 = vmatprep.subr.mxu0 0.0
        %1343 = vmatpush1.msra.mxu0 0.0
        %1344 = vmatprep.subr.mxu0 0.0
        %1345 = vmatpush1.msra.mxu0 0.0
        %1346 = vmatprep.subr.mxu0 0.0
        %1347 = vmatpush1.msra.mxu0 0.0
        %1348 = vmatprep.subr.mxu0 0.0
        %1349 = vmatpush1.msra.mxu0 0.0
        %1350 = vmatprep.subr.mxu0 0.0
        %1351 = vmatpush1.msra.mxu0 0.0
        %1352 = vmatprep.subr.mxu0 0.0
        %1353 = vmatpush1.msra.mxu0 0.0
        %1354 = vmatprep.subr.mxu0 0.0
        %1355 = vmatpush1.msra.mxu0 0.0
        %1356 = vmatprep.subr.mxu0 0.0
        %1357 = vmatpush1.msra.mxu0 0.0
        %1358 = vmatprep.subr.mxu0 0.0
        %1359 = vmatpush1.msra.mxu0 0.0
        %1360 = vmatprep.subr.mxu0 0.0
        %1361 = vmatpush1.msra.mxu0 0.0
        %1362 = vmatprep.subr.mxu0 0.0
        %1363 = vmatpush1.msra.mxu0 0.0
        %1364 = vmatprep.subr.mxu0 0.0
        %1365 = vmatpush1.msra.mxu0 0.0
        %1366 = vmatprep.subr.mxu0 0.0
        %1367 = vmatpush1.msra.mxu0 0.0
        %1368 = vmatprep.subr.mxu0 0.0
        %1369 = vmatpush1.msra.mxu0 0.0
        %1370 = vmatprep.subr.mxu0 0.0
        %1371 = vmatpush1.msra.mxu0 0.0
        %1372 = vmatprep.subr.mxu0 0.0
        %1373 = vmatpush1.msra.mxu0 0.0
        %1374 = vmatprep.subr.mxu0 0.0
        %1375 = vmatpush1.msra.mxu0 0.0
        %1376 = vmatprep.subr.mxu0 0.0
        %1377 = vmatpush1.msra.mxu0 0.0
        %1378 = vmatprep.subr.mxu0 0.0
        %1379 = vmatpush1.msra.mxu0 0.0
        %1380 = vmatprep.subr.mxu0 0.0
        %1381 = vmatpush1.msra.mxu0 0.0
        %1382 = vmatprep.subr.mxu0 0.0
        %1383 = vmatpush1.msra.mxu0 0.0
        %1384 = vmatprep.subr.mxu0 0.0
        %1385 = vmatpush1.msra.mxu0 0.0
        %1386 = vmatprep.mubr.f32.mxu0 0.0
        %1387 = vmatmul.mubr.f32.gmra.mrb[0].mxu0 %v1320
        %v1388 = vpop.f32.mrb[0].mxu0
        %v1389 = vadd.f32 0.0, %v1388
        %v1390 = vpop.f32.mrb[0].mxu0
        %1391 = vdwg.mxu0
        %1393 = vrot.lane.b32.xlu0 %v1055, 32
        %v1394 = vpop.permute.xlu0 %1393
        %1397 = vrot.lane.b32.xlu0 %v1222, 64
        %v1398 = vpop.permute.xlu0 %1397
        %1401 = vrot.lane.b32.xlu0 %v1389, 96
        %v1402 = vpop.permute.xlu0 %1401
        %v1404 = vsel %vm726, %v887, %v1394
        %vm1405 = vcmask 523264
        %v1406 = vsel %vm1405, %v1404, %v1398
        %vm1407 = vcmask 785408
        %v1408 = vsel %vm1407, %v1406, %v1402
        %v1409 = vld [vmem:[#allocation7] sm:$0xff]
        %v1410 = vld [vmem:[#allocation7 + $0x8] sm:$0xff]
        %v1411 = vld [vmem:[#allocation7 + $0x10] sm:$0xff]
        %v1412 = vld [vmem:[#allocation7 + $0x18] sm:$0xff]
        %v1413 = vld [vmem:[#allocation7 + $0x20] sm:$0xff]
        %v1414 = vld [vmem:[#allocation7 + $0x28] sm:$0xff]
        %v1415 = vld [vmem:[#allocation7 + $0x30] sm:$0xff]
        %v1416 = vld [vmem:[#allocation7 + $0x38] sm:$0xff]
        %v1417 = vld [vmem:[#allocation7 + $0x40] sm:$0xff]
        %v1418 = vld [vmem:[#allocation7 + $0x48] sm:$0xff]
        %v1419 = vld [vmem:[#allocation7 + $0x50] sm:$0xff]
        %v1420 = vld [vmem:[#allocation7 + $0x58] sm:$0xff]
        %v1421 = vld [vmem:[#allocation7 + $0x60] sm:$0xff]
        %v1422 = vld [vmem:[#allocation7 + $0x68] sm:$0xff]
        %v1423 = vld [vmem:[#allocation7 + $0x70] sm:$0xff]
        %v1424 = vld [vmem:[#allocation7 + $0x78] sm:$0xff]
        %v1425 = vld [vmem:[%s4] sm:$0x1]
        %v1427 = vlaneseq
        %v1428 = vshrl.u32 %v1427, 7
        %v1429 = vsub.s32 0, %v1428
        %v1430 = vrot.slane %v1425, %v1429
        %1432 = vmatprep.subr.mxu0 0.0
        %1433 = vmatpush1.msra.mxu0 %v1409
        %1434 = vmatprep.subr.mxu0 0.0
        %1435 = vmatpush1.msra.mxu0 %v1410
        %1436 = vmatprep.subr.mxu0 0.0
        %1437 = vmatpush1.msra.mxu0 %v1411
        %1438 = vmatprep.subr.mxu0 0.0
        %1439 = vmatpush1.msra.mxu0 %v1412
        %1440 = vmatprep.subr.mxu0 0.0
        %1441 = vmatpush1.msra.mxu0 %v1413
        %1442 = vmatprep.subr.mxu0 0.0
        %1443 = vmatpush1.msra.mxu0 %v1414
        %1444 = vmatprep.subr.mxu0 0.0
        %1445 = vmatpush1.msra.mxu0 %v1415
        %1446 = vmatprep.subr.mxu0 0.0
        %1447 = vmatpush1.msra.mxu0 %v1416
        %1448 = vmatprep.subr.mxu0 0.0
        %1449 = vmatpush1.msra.mxu0 %v1417
        %1450 = vmatprep.subr.mxu0 0.0
        %1451 = vmatpush1.msra.mxu0 %v1418
        %1452 = vmatprep.subr.mxu0 0.0
        %1453 = vmatpush1.msra.mxu0 %v1419
        %1454 = vmatprep.subr.mxu0 0.0
        %1455 = vmatpush1.msra.mxu0 %v1420
        %1456 = vmatprep.subr.mxu0 0.0
        %1457 = vmatpush1.msra.mxu0 %v1421
        %1458 = vmatprep.subr.mxu0 0.0
        %1459 = vmatpush1.msra.mxu0 %v1422
        %1460 = vmatprep.subr.mxu0 0.0
        %1461 = vmatpush1.msra.mxu0 %v1423
        %1462 = vmatprep.subr.mxu0 0.0
        %1463 = vmatpush1.msra.mxu0 %v1424
        %1464 = vmatprep.subr.mxu0 0.0
        %1465 = vmatpush1.msra.mxu0 0.0
        %1466 = vmatprep.subr.mxu0 0.0
        %1467 = vmatpush1.msra.mxu0 0.0
        %1468 = vmatprep.subr.mxu0 0.0
        %1469 = vmatpush1.msra.mxu0 0.0
        %1470 = vmatprep.subr.mxu0 0.0
        %1471 = vmatpush1.msra.mxu0 0.0
        %1472 = vmatprep.subr.mxu0 0.0
        %1473 = vmatpush1.msra.mxu0 0.0
        %1474 = vmatprep.subr.mxu0 0.0
        %1475 = vmatpush1.msra.mxu0 0.0
        %1476 = vmatprep.subr.mxu0 0.0
        %1477 = vmatpush1.msra.mxu0 0.0
        %1478 = vmatprep.subr.mxu0 0.0
        %1479 = vmatpush1.msra.mxu0 0.0
        %1480 = vmatprep.subr.mxu0 0.0
        %1481 = vmatpush1.msra.mxu0 0.0
        %1482 = vmatprep.subr.mxu0 0.0
        %1483 = vmatpush1.msra.mxu0 0.0
        %1484 = vmatprep.subr.mxu0 0.0
        %1485 = vmatpush1.msra.mxu0 0.0
        %1486 = vmatprep.subr.mxu0 0.0
        %1487 = vmatpush1.msra.mxu0 0.0
        %1488 = vmatprep.subr.mxu0 0.0
        %1489 = vmatpush1.msra.mxu0 0.0
        %1490 = vmatprep.subr.mxu0 0.0
        %1491 = vmatpush1.msra.mxu0 0.0
        %1492 = vmatprep.subr.mxu0 0.0
        %1493 = vmatpush1.msra.mxu0 0.0
        %1494 = vmatprep.subr.mxu0 0.0
        %1495 = vmatpush1.msra.mxu0 0.0
        %1496 = vmatprep.mubr.f32.mxu0 0.0
        %1497 = vmatmul.mubr.f32.gmra.mrb[0].mxu0 %v1408
        %v1498 = vpop.f32.mrb[0].mxu0
        %v1499 = vadd.f32 %v1430, %v1498
        %v1500 = vpop.f32.mrb[0].mxu0
        %1501 = vdwg.mxu0
        %v1502 = vld [vmem:[%s5] sm:$0x1]
        %v1503 = vld [vmem:[%s6] sm:$0x1]
        %1504 = vadd.xlane.f32.xlu0 %v1499
        %v1505 = vpop.xlane.xlu0 %1504
        %v1506 = vrcp.pop 128.0
        %v1507 = vmul.f32 %v1505, %v1506
        %v1508 = vsub.f32 %v1499, %v1507
        %v1509 = vmul.f32 %v1508, %v1508
        %1510 = vadd.xlane.f32.xlu0 %v1509
        %v1511 = vpop.xlane.xlu0 %1510
        %v1512 = vmul.f32 %v1511, %v1506
        %v1513 = vadd.f32 %v1512, 1e-05
        %v1514 = vrsqrt.pop %v1513
        %v1515 = vmul.f32 %v1508, %v1514
        %v1517 = vlaneseq
        %v1518 = vshrl.u32 %v1517, 7
        %v1519 = vsub.s32 0, %v1518
        %v1520 = vrot.slane %v1502, %v1519
        %v1522 = vmul.f32 %v1515, %v1520
        %v1524 = vlaneseq
        %v1525 = vshrl.u32 %v1524, 7
        %v1526 = vsub.s32 0, %v1525
        %v1527 = vrot.slane %v1503, %v1526
        %v1529 = vadd.f32 %v1522, %v1527
        %v1530 = vadd.f32 %v514, %v1529
        %v1531 = vld [vmem:[#allocation8] sm:$0xff]
        %v1532 = vld [vmem:[#allocation8 + $0x8] sm:$0xff]
        %v1533 = vld [vmem:[#allocation8 + $0x10] sm:$0xff]
        %v1534 = vld [vmem:[#allocation8 + $0x18] sm:$0xff]
        %v1535 = vld [vmem:[#allocation8 + $0x20] sm:$0xff]
        %v1536 = vld [vmem:[#allocation8 + $0x28] sm:$0xff]
        %v1537 = vld [vmem:[#allocation8 + $0x30] sm:$0xff]
        %v1538 = vld [vmem:[#allocation8 + $0x38] sm:$0xff]
        %v1539 = vld [vmem:[#allocation8 + $0x40] sm:$0xff]
        %v1540 = vld [vmem:[#allocation8 + $0x48] sm:$0xff]
        %v1541 = vld [vmem:[#allocation8 + $0x50] sm:$0xff]
        %v1542 = vld [vmem:[#allocation8 + $0x58] sm:$0xff]
        %v1543 = vld [vmem:[#allocation8 + $0x60] sm:$0xff]
        %v1544 = vld [vmem:[#allocation8 + $0x68] sm:$0xff]
        %v1545 = vld [vmem:[#allocation8 + $0x70] sm:$0xff]
        %v1546 = vld [vmem:[#allocation8 + $0x78] sm:$0xff]
        %v1547 = vld [vmem:[#allocation8 + $0x80] sm:$0xff]
        %v1548 = vld [vmem:[#allocation8 + $0x88] sm:$0xff]
        %v1549 = vld [vmem:[#allocation8 + $0x90] sm:$0xff]
        %v1550 = vld [vmem:[#allocation8 + $0x98] sm:$0xff]
        %v1551 = vld [vmem:[#allocation8 + $0xa0] sm:$0xff]
        %v1552 = vld [vmem:[#allocation8 + $0xa8] sm:$0xff]
        %v1553 = vld [vmem:[#allocation8 + $0xb0] sm:$0xff]
        %v1554 = vld [vmem:[#allocation8 + $0xb8] sm:$0xff]
        %v1555 = vld [vmem:[#allocation8 + $0xc0] sm:$0xff]
        %v1556 = vld [vmem:[#allocation8 + $0xc8] sm:$0xff]
        %v1557 = vld [vmem:[#allocation8 + $0xd0] sm:$0xff]
        %v1558 = vld [vmem:[#allocation8 + $0xd8] sm:$0xff]
        %v1559 = vld [vmem:[#allocation8 + $0xe0] sm:$0xff]
        %v1560 = vld [vmem:[#allocation8 + $0xe8] sm:$0xff]
        %v1561 = vld [vmem:[#allocation8 + $0xf0] sm:$0xff]
        %v1562 = vld [vmem:[#allocation8 + $0xf8] sm:$0xff]
        %v1563 = vld [vmem:[#allocation8 + $0x100] sm:$0xff]
        %v1564 = vld [vmem:[#allocation8 + $0x108] sm:$0xff]
        %v1565 = vld [vmem:[#allocation8 + $0x110] sm:$0xff]
        %v1566 = vld [vmem:[#allocation8 + $0x118] sm:$0xff]
        %v1567 = vld [vmem:[#allocation8 + $0x120] sm:$0xff]
        %v1568 = vld [vmem:[#allocation8 + $0x128] sm:$0xff]
        %v1569 = vld [vmem:[#allocation8 + $0x130] sm:$0xff]
        %v1570 = vld [vmem:[#allocation8 + $0x138] sm:$0xff]
        %v1571 = vld [vmem:[#allocation8 + $0x140] sm:$0xff]
        %v1572 = vld [vmem:[#allocation8 + $0x148] sm:$0xff]
        %v1573 = vld [vmem:[#allocation8 + $0x150] sm:$0xff]
        %v1574 = vld [vmem:[#allocation8 + $0x158] sm:$0xff]
        %v1575 = vld [vmem:[#allocation8 + $0x160] sm:$0xff]
        %v1576 = vld [vmem:[#allocation8 + $0x168] sm:$0xff]
        %v1577 = vld [vmem:[#allocation8 + $0x170] sm:$0xff]
        %v1578 = vld [vmem:[#allocation8 + $0x178] sm:$0xff]
        %v1579 = vld [vmem:[#allocation8 + $0x180] sm:$0xff]
        %v1580 = vld [vmem:[#allocation8 + $0x188] sm:$0xff]
        %v1581 = vld [vmem:[#allocation8 + $0x190] sm:$0xff]
        %v1582 = vld [vmem:[#allocation8 + $0x198] sm:$0xff]
        %v1583 = vld [vmem:[#allocation8 + $0x1a0] sm:$0xff]
        %v1584 = vld [vmem:[#allocation8 + $0x1a8] sm:$0xff]
        %v1585 = vld [vmem:[#allocation8 + $0x1b0] sm:$0xff]
        %v1586 = vld [vmem:[#allocation8 + $0x1b8] sm:$0xff]
        %v1587 = vld [vmem:[#allocation8 + $0x1c0] sm:$0xff]
        %v1588 = vld [vmem:[#allocation8 + $0x1c8] sm:$0xff]
        %v1589 = vld [vmem:[#allocation8 + $0x1d0] sm:$0xff]
        %v1590 = vld [vmem:[#allocation8 + $0x1d8] sm:$0xff]
        %v1591 = vld [vmem:[#allocation8 + $0x1e0] sm:$0xff]
        %v1592 = vld [vmem:[#allocation8 + $0x1e8] sm:$0xff]
        %v1593 = vld [vmem:[#allocation8 + $0x1f0] sm:$0xff]
        %v1594 = vld [vmem:[#allocation8 + $0x1f8] sm:$0xff]
        %v1595 = vld [vmem:[%s8] sm:$0xf]
        %v1597 = vlaneseq
        %v1598 = vshrl.u32 %v1597, 7
        %v1599 = vsub.s32 0, %v1598
        %v1600 = vrot.slane %v1595, %v1599
        %v1601 = vlaneseq
        %v1602 = vshrl.u32 %v1601, 7
        %v1603 = vsub.s32 1, %v1602
        %v1604 = vrot.slane %v1595, %v1603
        %v1605 = vlaneseq
        %v1606 = vshrl.u32 %v1605, 7
        %v1607 = vsub.s32 2, %v1606
        %v1608 = vrot.slane %v1595, %v1607
        %v1609 = vlaneseq
        %v1610 = vshrl.u32 %v1609, 7
        %v1611 = vsub.s32 3, %v1610
        %v1612 = vrot.slane %v1595, %v1611
        %1617 = vmatprep.subr.mxu0 %v1532
        %1618 = vmatpush1.msra.mxu0 %v1531
        %1619 = vmatprep.subr.mxu0 %v1536
        %1620 = vmatpush1.msra.mxu0 %v1535
        %1621 = vmatprep.subr.mxu0 %v1540
        %1622 = vmatpush1.msra.mxu0 %v1539
        %1623 = vmatprep.subr.mxu0 %v1544
        %1624 = vmatpush1.msra.mxu0 %v1543
        %1625 = vmatprep.subr.mxu0 %v1548
        %1626 = vmatpush1.msra.mxu0 %v1547
        %1627 = vmatprep.subr.mxu0 %v1552
        %1628 = vmatpush1.msra.mxu0 %v1551
        %1629 = vmatprep.subr.mxu0 %v1556
        %1630 = vmatpush1.msra.mxu0 %v1555
        %1631 = vmatprep.subr.mxu0 %v1560
        %1632 = vmatpush1.msra.mxu0 %v1559
        %1633 = vmatprep.subr.mxu0 %v1564
        %1634 = vmatpush1.msra.mxu0 %v1563
        %1635 = vmatprep.subr.mxu0 %v1568
        %1636 = vmatpush1.msra.mxu0 %v1567
        %1637 = vmatprep.subr.mxu0 %v1572
        %1638 = vmatpush1.msra.mxu0 %v1571
        %1639 = vmatprep.subr.mxu0 %v1576
        %1640 = vmatpush1.msra.mxu0 %v1575
        %1641 = vmatprep.subr.mxu0 %v1580
        %1642 = vmatpush1.msra.mxu0 %v1579
        %1643 = vmatprep.subr.mxu0 %v1584
        %1644 = vmatpush1.msra.mxu0 %v1583
        %1645 = vmatprep.subr.mxu0 %v1588
        %1646 = vmatpush1.msra.mxu0 %v1587
        %1647 = vmatprep.subr.mxu0 %v1592
        %1648 = vmatpush1.msra.mxu0 %v1591
        %1649 = vmatprep.subr.mxu0 0.0
        %1650 = vmatpush1.msra.mxu0 0.0
        %1651 = vmatprep.subr.mxu0 0.0
        %1652 = vmatpush1.msra.mxu0 0.0
        %1653 = vmatprep.subr.mxu0 0.0
        %1654 = vmatpush1.msra.mxu0 0.0
        %1655 = vmatprep.subr.mxu0 0.0
        %1656 = vmatpush1.msra.mxu0 0.0
        %1657 = vmatprep.subr.mxu0 0.0
        %1658 = vmatpush1.msra.mxu0 0.0
        %1659 = vmatprep.subr.mxu0 0.0
        %1660 = vmatpush1.msra.mxu0 0.0
        %1661 = vmatprep.subr.mxu0 0.0
        %1662 = vmatpush1.msra.mxu0 0.0
        %1663 = vmatprep.subr.mxu0 0.0
        %1664 = vmatpush1.msra.mxu0 0.0
        %1665 = vmatprep.subr.mxu0 0.0
        %1666 = vmatpush1.msra.mxu0 0.0
        %1667 = vmatprep.subr.mxu0 0.0
        %1668 = vmatpush1.msra.mxu0 0.0
        %1669 = vmatprep.subr.mxu0 0.0
        %1670 = vmatpush1.msra.mxu0 0.0
        %1671 = vmatprep.subr.mxu0 0.0
        %1672 = vmatpush1.msra.mxu0 0.0
        %1673 = vmatprep.subr.mxu0 0.0
        %1674 = vmatpush1.msra.mxu0 0.0
        %1675 = vmatprep.subr.mxu0 0.0
        %1676 = vmatpush1.msra.mxu0 0.0
        %1677 = vmatprep.subr.mxu0 0.0
        %1678 = vmatpush1.msra.mxu0 0.0
        %1679 = vmatprep.subr.mxu0 0.0
        %1680 = vmatpush1.msra.mxu0 0.0
        %1681 = vmatprep.mubr.f32.mxu0 0.0
        %1682 = vmatmul.mubr.f32.gmra.mrb[0].mxu0 %v1530
        %v1683 = vpop.f32.mrb[0].mxu0
        %v1684 = vadd.f32 %v1600, %v1683
        %v1685 = vpop.f32.mrb[0].mxu0
        %v1686 = vadd.f32 %v1604, %v1685
        %1687 = vdwg.mxu0
        %1688 = vmatprep.subr.mxu0 %v1534
        %1689 = vmatpush1.msra.mxu0 %v1533
        %1690 = vmatprep.subr.mxu0 %v1538
        %1691 = vmatpush1.msra.mxu0 %v1537
        %1692 = vmatprep.subr.mxu0 %v1542
        %1693 = vmatpush1.msra.mxu0 %v1541
        %1694 = vmatprep.subr.mxu0 %v1546
        %1695 = vmatpush1.msra.mxu0 %v1545
        %1696 = vmatprep.subr.mxu0 %v1550
        %1697 = vmatpush1.msra.mxu0 %v1549
        %1698 = vmatprep.subr.mxu0 %v1554
        %1699 = vmatpush1.msra.mxu0 %v1553
        %1700 = vmatprep.subr.mxu0 %v1558
        %1701 = vmatpush1.msra.mxu0 %v1557
        %1702 = vmatprep.subr.mxu0 %v1562
        %1703 = vmatpush1.msra.mxu0 %v1561
        %1704 = vmatprep.subr.mxu0 %v1566
        %1705 = vmatpush1.msra.mxu0 %v1565
        %1706 = vmatprep.subr.mxu0 %v1570
        %1707 = vmatpush1.msra.mxu0 %v1569
        %1708 = vmatprep.subr.mxu0 %v1574
        %1709 = vmatpush1.msra.mxu0 %v1573
        %1710 = vmatprep.subr.mxu0 %v1578
        %1711 = vmatpush1.msra.mxu0 %v1577
        %1712 = vmatprep.subr.mxu0 %v1582
        %1713 = vmatpush1.msra.mxu0 %v1581
        %1714 = vmatprep.subr.mxu0 %v1586
        %1715 = vmatpush1.msra.mxu0 %v1585
        %1716 = vmatprep.subr.mxu0 %v1590
        %1717 = vmatpush1.msra.mxu0 %v1589
        %1718 = vmatprep.subr.mxu0 %v1594
        %1719 = vmatpush1.msra.mxu0 %v1593
        %1720 = vmatprep.subr.mxu0 0.0
        %1721 = vmatpush1.msra.mxu0 0.0
        %1722 = vmatprep.subr.mxu0 0.0
        %1723 = vmatpush1.msra.mxu0 0.0
        %1724 = vmatprep.subr.mxu0 0.0
        %1725 = vmatpush1.msra.mxu0 0.0
        %1726 = vmatprep.subr.mxu0 0.0
        %1727 = vmatpush1.msra.mxu0 0.0
        %1728 = vmatprep.subr.mxu0 0.0
        %1729 = vmatpush1.msra.mxu0 0.0
        %1730 = vmatprep.subr.mxu0 0.0
        %1731 = vmatpush1.msra.mxu0 0.0
        %1732 = vmatprep.subr.mxu0 0.0
        %1733 = vmatpush1.msra.mxu0 0.0
        %1734 = vmatprep.subr.mxu0 0.0
        %1735 = vmatpush1.msra.mxu0 0.0
        %1736 = vmatprep.subr.mxu0 0.0
        %1737 = vmatpush1.msra.mxu0 0.0
        %1738 = vmatprep.subr.mxu0 0.0
        %1739 = vmatpush1.msra.mxu0 0.0
        %1740 = vmatprep.subr.mxu0 0.0
        %1741 = vmatpush1.msra.mxu0 0.0
        %1742 = vmatprep.subr.mxu0 0.0
        %1743 = vmatpush1.msra.mxu0 0.0
        %1744 = vmatprep.subr.mxu0 0.0
        %1745 = vmatpush1.msra.mxu0 0.0
        %1746 = vmatprep.subr.mxu0 0.0
        %1747 = vmatpush1.msra.mxu0 0.0
        %1748 = vmatprep.subr.mxu0 0.0
        %1749 = vmatpush1.msra.mxu0 0.0
        %1750 = vmatprep.subr.mxu0 0.0
        %1751 = vmatpush1.msra.mxu0 0.0
        %1752 = vmatprep.mubr.f32.mxu0 0.0
        %1753 = vmatmul.mubr.f32.gmra.mrb[0].mxu0 %v1530
        %v1754 = vpop.f32.mrb[0].mxu0
        %v1755 = vadd.f32 %v1608, %v1754
        %v1756 = vpop.f32.mrb[0].mxu0
        %v1757 = vadd.f32 %v1612, %v1756
        %1758 = vdwg.mxu0
        %v1759 = vmul.f32 %v1684, 0.5
        %v1760 = vmul.f32 %v1686, 0.5
        %v1761 = vmul.f32 %v1755, 0.5
        %v1762 = vmul.f32 %v1757, 0.5
        %v1763 = vmul.f32 %v1684, 0.044715
        %v1764 = vmul.f32 %v1686, 0.044715
        %v1765 = vmul.f32 %v1755, 0.044715
        %v1766 = vmul.f32 %v1757, 0.044715
        %v1767 = vmul.f32 %v1763, %v1684
        %v1768 = vmul.f32 %v1764, %v1686
        %v1769 = vmul.f32 %v1765, %v1755
        %v1770 = vmul.f32 %v1766, %v1757
        %v1771 = vmul.f32 %v1767, %v1684
        %v1772 = vmul.f32 %v1768, %v1686
        %v1773 = vmul.f32 %v1769, %v1755
        %v1774 = vmul.f32 %v1770, %v1757
        %v1775 = vadd.f32 %v1684, %v1771
        %v1776 = vadd.f32 %v1686, %v1772
        %v1777 = vadd.f32 %v1755, %v1773
        %v1778 = vadd.f32 %v1757, %v1774
        %v1779 = vmul.f32 %v1775, 0.7978846
        %v1780 = vmul.f32 %v1776, 0.7978846
        %v1781 = vmul.f32 %v1777, 0.7978846
        %v1782 = vmul.f32 %v1778, 0.7978846
        %v1783 = vtanh.pop %v1779
        %v1784 = vtanh.pop %v1780
        %v1785 = vtanh.pop %v1781
        %v1786 = vtanh.pop %v1782
        %v1787 = vadd.f32 %v1783, 1.0
        %v1788 = vadd.f32 %v1784, 1.0
        %v1789 = vadd.f32 %v1785, 1.0
        %v1790 = vadd.f32 %v1786, 1.0
        %v1791 = vmul.f32 %v1759, %v1787
        %v1792 = vmul.f32 %v1760, %v1788
        %v1793 = vmul.f32 %v1761, %v1789
        %v1794 = vmul.f32 %v1762, %v1790
        %v1795 = vld [vmem:[#allocation10] sm:$0xff]
        %v1796 = vld [vmem:[#allocation10 + $0x8] sm:$0xff]
        %v1797 = vld [vmem:[#allocation10 + $0x10] sm:$0xff]
        %v1798 = vld [vmem:[#allocation10 + $0x18] sm:$0xff]
        %v1799 = vld [vmem:[#allocation10 + $0x20] sm:$0xff]
        %v1800 = vld [vmem:[#allocation10 + $0x28] sm:$0xff]
        %v1801 = vld [vmem:[#allocation10 + $0x30] sm:$0xff]
        %v1802 = vld [vmem:[#allocation10 + $0x38] sm:$0xff]
        %v1803 = vld [vmem:[#allocation10 + $0x40] sm:$0xff]
        %v1804 = vld [vmem:[#allocation10 + $0x48] sm:$0xff]
        %v1805 = vld [vmem:[#allocation10 + $0x50] sm:$0xff]
        %v1806 = vld [vmem:[#allocation10 + $0x58] sm:$0xff]
        %v1807 = vld [vmem:[#allocation10 + $0x60] sm:$0xff]
        %v1808 = vld [vmem:[#allocation10 + $0x68] sm:$0xff]
        %v1809 = vld [vmem:[#allocation10 + $0x70] sm:$0xff]
        %v1810 = vld [vmem:[#allocation10 + $0x78] sm:$0xff]
        %v1811 = vld [vmem:[#allocation10 + $0x80] sm:$0xff]
        %v1812 = vld [vmem:[#allocation10 + $0x88] sm:$0xff]
        %v1813 = vld [vmem:[#allocation10 + $0x90] sm:$0xff]
        %v1814 = vld [vmem:[#allocation10 + $0x98] sm:$0xff]
        %v1815 = vld [vmem:[#allocation10 + $0xa0] sm:$0xff]
        %v1816 = vld [vmem:[#allocation10 + $0xa8] sm:$0xff]
        %v1817 = vld [vmem:[#allocation10 + $0xb0] sm:$0xff]
        %v1818 = vld [vmem:[#allocation10 + $0xb8] sm:$0xff]
        %v1819 = vld [vmem:[#allocation10 + $0xc0] sm:$0xff]
        %v1820 = vld [vmem:[#allocation10 + $0xc8] sm:$0xff]
        %v1821 = vld [vmem:[#allocation10 + $0xd0] sm:$0xff]
        %v1822 = vld [vmem:[#allocation10 + $0xd8] sm:$0xff]
        %v1823 = vld [vmem:[#allocation10 + $0xe0] sm:$0xff]
        %v1824 = vld [vmem:[#allocation10 + $0xe8] sm:$0xff]
        %v1825 = vld [vmem:[#allocation10 + $0xf0] sm:$0xff]
        %v1826 = vld [vmem:[#allocation10 + $0xf8] sm:$0xff]
        %v1827 = vld [vmem:[#allocation10 + $0x100] sm:$0xff]
        %v1828 = vld [vmem:[#allocation10 + $0x108] sm:$0xff]
        %v1829 = vld [vmem:[#allocation10 + $0x110] sm:$0xff]
        %v1830 = vld [vmem:[#allocation10 + $0x118] sm:$0xff]
        %v1831 = vld [vmem:[#allocation10 + $0x120] sm:$0xff]
        %v1832 = vld [vmem:[#allocation10 + $0x128] sm:$0xff]
        %v1833 = vld [vmem:[#allocation10 + $0x130] sm:$0xff]
        %v1834 = vld [vmem:[#allocation10 + $0x138] sm:$0xff]
        %v1835 = vld [vmem:[#allocation10 + $0x140] sm:$0xff]
        %v1836 = vld [vmem:[#allocation10 + $0x148] sm:$0xff]
        %v1837 = vld [vmem:[#allocation10 + $0x150] sm:$0xff]
        %v1838 = vld [vmem:[#allocation10 + $0x158] sm:$0xff]
        %v1839 = vld [vmem:[#allocation10 + $0x160] sm:$0xff]
        %v1840 = vld [vmem:[#allocation10 + $0x168] sm:$0xff]
        %v1841 = vld [vmem:[#allocation10 + $0x170] sm:$0xff]
        %v1842 = vld [vmem:[#allocation10 + $0x178] sm:$0xff]
        %v1843 = vld [vmem:[#allocation10 + $0x180] sm:$0xff]
        %v1844 = vld [vmem:[#allocation10 + $0x188] sm:$0xff]
        %v1845 = vld [vmem:[#allocation10 + $0x190] sm:$0xff]
        %v1846 = vld [vmem:[#allocation10 + $0x198] sm:$0xff]
        %v1847 = vld [vmem:[#allocation10 + $0x1a0] sm:$0xff]
        %v1848 = vld [vmem:[#allocation10 + $0x1a8] sm:$0xff]
        %v1849 = vld [vmem:[#allocation10 + $0x1b0] sm:$0xff]
        %v1850 = vld [vmem:[#allocation10 + $0x1b8] sm:$0xff]
        %v1851 = vld [vmem:[#allocation10 + $0x1c0] sm:$0xff]
        %v1852 = vld [vmem:[#allocation10 + $0x1c8] sm:$0xff]
        %v1853 = vld [vmem:[#allocation10 + $0x1d0] sm:$0xff]
        %v1854 = vld [vmem:[#allocation10 + $0x1d8] sm:$0xff]
        %v1855 = vld [vmem:[#allocation10 + $0x1e0] sm:$0xff]
        %v1856 = vld [vmem:[#allocation10 + $0x1e8] sm:$0xff]
        %v1857 = vld [vmem:[#allocation10 + $0x1f0] sm:$0xff]
        %v1858 = vld [vmem:[#allocation10 + $0x1f8] sm:$0xff]
        %v1859 = vld [vmem:[%s10] sm:$0x1]
        %v1861 = vlaneseq
        %v1862 = vshrl.u32 %v1861, 7
        %v1863 = vsub.s32 0, %v1862
        %v1864 = vrot.slane %v1859, %v1863
        %1866 = vmatprep.subr.mxu0 0.0
        %1867 = vmatpush1.msra.mxu0 %v1795
        %1868 = vmatprep.subr.mxu0 0.0
        %1869 = vmatpush1.msra.mxu0 %v1796
        %1870 = vmatprep.subr.mxu0 0.0
        %1871 = vmatpush1.msra.mxu0 %v1797
        %1872 = vmatprep.subr.mxu0 0.0
        %1873 = vmatpush1.msra.mxu0 %v1798
        %1874 = vmatprep.subr.mxu0 0.0
        %1875 = vmatpush1.msra.mxu0 %v1799
        %1876 = vmatprep.subr.mxu0 0.0
        %1877 = vmatpush1.msra.mxu0 %v1800
        %1878 = vmatprep.subr.mxu0 0.0
        %1879 = vmatpush1.msra.mxu0 %v1801
        %1880 = vmatprep.subr.mxu0 0.0
        %1881 = vmatpush1.msra.mxu0 %v1802
        %1882 = vmatprep.subr.mxu0 0.0
        %1883 = vmatpush1.msra.mxu0 %v1803
        %1884 = vmatprep.subr.mxu0 0.0
        %1885 = vmatpush1.msra.mxu0 %v1804
        %1886 = vmatprep.subr.mxu0 0.0
        %1887 = vmatpush1.msra.mxu0 %v1805
        %1888 = vmatprep.subr.mxu0 0.0
        %1889 = vmatpush1.msra.mxu0 %v1806
        %1890 = vmatprep.subr.mxu0 0.0
        %1891 = vmatpush1.msra.mxu0 %v1807
        %1892 = vmatprep.subr.mxu0 0.0
        %1893 = vmatpush1.msra.mxu0 %v1808
        %1894 = vmatprep.subr.mxu0 0.0
        %1895 = vmatpush1.msra.mxu0 %v1809
        %1896 = vmatprep.subr.mxu0 0.0
        %1897 = vmatpush1.msra.mxu0 %v1810
        %1898 = vmatprep.subr.mxu0 0.0
        %1899 = vmatpush1.msra.mxu0 %v1811
        %1900 = vmatprep.subr.mxu0 0.0
        %1901 = vmatpush1.msra.mxu0 %v1812
        %1902 = vmatprep.subr.mxu0 0.0
        %1903 = vmatpush1.msra.mxu0 %v1813
        %1904 = vmatprep.subr.mxu0 0.0
        %1905 = vmatpush1.msra.mxu0 %v1814
        %1906 = vmatprep.subr.mxu0 0.0
        %1907 = vmatpush1.msra.mxu0 %v1815
        %1908 = vmatprep.subr.mxu0 0.0
        %1909 = vmatpush1.msra.mxu0 %v1816
        %1910 = vmatprep.subr.mxu0 0.0
        %1911 = vmatpush1.msra.mxu0 %v1817
        %1912 = vmatprep.subr.mxu0 0.0
        %1913 = vmatpush1.msra.mxu0 %v1818
        %1914 = vmatprep.subr.mxu0 0.0
        %1915 = vmatpush1.msra.mxu0 %v1819
        %1916 = vmatprep.subr.mxu0 0.0
        %1917 = vmatpush1.msra.mxu0 %v1820
        %1918 = vmatprep.subr.mxu0 0.0
        %1919 = vmatpush1.msra.mxu0 %v1821
        %1920 = vmatprep.subr.mxu0 0.0
        %1921 = vmatpush1.msra.mxu0 %v1822
        %1922 = vmatprep.subr.mxu0 0.0
        %1923 = vmatpush1.msra.mxu0 %v1823
        %1924 = vmatprep.subr.mxu0 0.0
        %1925 = vmatpush1.msra.mxu0 %v1824
        %1926 = vmatprep.subr.mxu0 0.0
        %1927 = vmatpush1.msra.mxu0 %v1825
        %1928 = vmatprep.subr.mxu0 0.0
        %1929 = vmatpush1.msra.mxu0 %v1826
        %1930 = vmatprep.mubr.f32.mxu0 %v1792
        %1931 = vmatmul.mubr.f32.gmra.mrb[0].mxu0 %v1791
        %v1932 = vpop.f32.mrb[0].mxu0
        %v1933 = vadd.f32 %v1864, %v1932
        %v1934 = vpop.f32.mrb[0].mxu0
        %1935 = vdwg.mxu0
        %1936 = vmatprep.subr.mxu0 0.0
        %1937 = vmatpush1.msra.mxu0 %v1827
        %1938 = vmatprep.subr.mxu0 0.0
        %1939 = vmatpush1.msra.mxu0 %v1828
        %1940 = vmatprep.subr.mxu0 0.0
        %1941 = vmatpush1.msra.mxu0 %v1829
        %1942 = vmatprep.subr.mxu0 0.0
        %1943 = vmatpush1.msra.mxu0 %v1830
        %1944 = vmatprep.subr.mxu0 0.0
        %1945 = vmatpush1.msra.mxu0 %v1831
        %1946 = vmatprep.subr.mxu0 0.0
        %1947 = vmatpush1.msra.mxu0 %v1832
        %1948 = vmatprep.subr.mxu0 0.0
        %1949 = vmatpush1.msra.mxu0 %v1833
        %1950 = vmatprep.subr.mxu0 0.0
        %1951 = vmatpush1.msra.mxu0 %v1834
        %1952 = vmatprep.subr.mxu0 0.0
        %1953 = vmatpush1.msra.mxu0 %v1835
        %1954 = vmatprep.subr.mxu0 0.0
        %1955 = vmatpush1.msra.mxu0 %v1836
        %1956 = vmatprep.subr.mxu0 0.0
        %1957 = vmatpush1.msra.mxu0 %v1837
        %1958 = vmatprep.subr.mxu0 0.0
        %1959 = vmatpush1.msra.mxu0 %v1838
        %1960 = vmatprep.subr.mxu0 0.0
        %1961 = vmatpush1.msra.mxu0 %v1839
        %1962 = vmatprep.subr.mxu0 0.0
        %1963 = vmatpush1.msra.mxu0 %v1840
        %1964 = vmatprep.subr.mxu0 0.0
        %1965 = vmatpush1.msra.mxu0 %v1841
        %1966 = vmatprep.subr.mxu0 0.0
        %1967 = vmatpush1.msra.mxu0 %v1842
        %1968 = vmatprep.subr.mxu0 0.0
        %1969 = vmatpush1.msra.mxu0 %v1843
        %1970 = vmatprep.subr.mxu0 0.0
        %1971 = vmatpush1.msra.mxu0 %v1844
        %1972 = vmatprep.subr.mxu0 0.0
        %1973 = vmatpush1.msra.mxu0 %v1845
        %1974 = vmatprep.subr.mxu0 0.0
        %1975 = vmatpush1.msra.mxu0 %v1846
        %1976 = vmatprep.subr.mxu0 0.0
        %1977 = vmatpush1.msra.mxu0 %v1847
        %1978 = vmatprep.subr.mxu0 0.0
        %1979 = vmatpush1.msra.mxu0 %v1848
        %1980 = vmatprep.subr.mxu0 0.0
        %1981 = vmatpush1.msra.mxu0 %v1849
        %1982 = vmatprep.subr.mxu0 0.0
        %1983 = vmatpush1.msra.mxu0 %v1850
        %1984 = vmatprep.subr.mxu0 0.0
        %1985 = vmatpush1.msra.mxu0 %v1851
        %1986 = vmatprep.subr.mxu0 0.0
        %1987 = vmatpush1.msra.mxu0 %v1852
        %1988 = vmatprep.subr.mxu0 0.0
        %1989 = vmatpush1.msra.mxu0 %v1853
        %1990 = vmatprep.subr.mxu0 0.0
        %1991 = vmatpush1.msra.mxu0 %v1854
        %1992 = vmatprep.subr.mxu0 0.0
        %1993 = vmatpush1.msra.mxu0 %v1855
        %1994 = vmatprep.subr.mxu0 0.0
        %1995 = vmatpush1.msra.mxu0 %v1856
        %1996 = vmatprep.subr.mxu0 0.0
        %1997 = vmatpush1.msra.mxu0 %v1857
        %1998 = vmatprep.subr.mxu0 0.0
        %1999 = vmatpush1.msra.mxu0 %v1858
        %2000 = vmatprep.mubr.f32.mxu0 %v1794
        %2001 = vmatmul.mubr.f32.gmra.mrb[0].mxu0 %v1793
        %v2002 = vpop.f32.mrb[0].mxu0
        %v2003 = vadd.f32 %v1933, %v2002
        %v2004 = vpop.f32.mrb[0].mxu0
        %2005 = vdwg.mxu0
        %v2006 = vld [vmem:[%s11] sm:$0x1]
        %v2007 = vld [vmem:[%s12] sm:$0x1]
        %2008 = vadd.xlane.f32.xlu0 %v2003
        %v2009 = vpop.xlane.xlu0 %2008
        %v2010 = vmul.f32 %v2009, %v1506
        %v2011 = vsub.f32 %v2003, %v2010
        %v2012 = vmul.f32 %v2011, %v2011
        %2013 = vadd.xlane.f32.xlu0 %v2012
        %v2014 = vpop.xlane.xlu0 %2013
        %v2015 = vmul.f32 %v2014, %v1506
        %v2016 = vadd.f32 %v2015, 1e-05
        %v2017 = vrsqrt.pop %v2016
        %v2018 = vmul.f32 %v2011, %v2017
        %v2020 = vlaneseq
        %v2021 = vshrl.u32 %v2020, 7
        %v2022 = vsub.s32 0, %v2021
        %v2023 = vrot.slane %v2006, %v2022
        %v2025 = vmul.f32 %v2018, %v2023
        %v2027 = vlaneseq
        %v2028 = vshrl.u32 %v2027, 7
        %v2029 = vsub.s32 0, %v2028
        %v2030 = vrot.slane %v2007, %v2029
        %v2032 = vadd.f32 %v2025, %v2030
        %v2033 = vadd.f32 %v1530, %v2032
        %2034 = vst [vmem:[%s513] sm:$0xff] %v2033
        %s2035 = sand.u32 %s318, 1
        %s2036 = scalar_lea.sflag [#allocation4], %s2035
        %s2037 = sand.u32 %s318, 1
        %s2038 = smul.addr %s2037, 8
        %s2039 = scalar_lea.vmem [#allocation11], %s2038
        // Predicated region
        $region93: #{tpu_custom_call.1} parent=71 // pred_check
          %p2040 = pneg %p328
        $region94: #{tpu_custom_call.1} parent=71 // pred_check_branch
          %2042 = sbr.rel (%p2040) target = $region96
        $region95: #{tpu_custom_call.1} parent=71 // pred_region
          %s2044 = ssub.s32 128, 128
          %2045 = vsyncadd %s2036, %s2044
          %s2046 = smul.addr %s32, 128
          %s2047 = scalar_lea.hbm %s13, %s2046
          %s2049 = sshll.u32 %s2039, 4
          %s2050 = int_to_ptr.vmem [resolvable:$true] %s2049
          %2052 = dma.vmem_to_hbm [thread:$0]  %s2050, 128, %s2047, %s2036
        $region96: #{tpu_custom_call.1} parent=71 // pred_fallthru
          _
      $region72: #{tpu_custom_call.1} parent=5 // pred_fallthru
        _
      %p2053 = scmp.le.s32.totalorder 2, %s27
      // Predicated region
      $region97: #{tpu_custom_call.1} parent=5 // pred_check
        %p2054 = pneg %p2053
      $region98: #{tpu_custom_call.1} parent=5 // pred_check_branch
        %2056 = sbr.rel (%p2054) target = $region100
      $region99: #{tpu_custom_call.1} parent=5 // pred_region
        %s2057 = ssub.s32 %s27, 2
        // Predicated region
        $region101: #{tpu_custom_call.1} parent=99 // pred_check
          %p2058 = pneg %p334
        $region102: #{tpu_custom_call.1} parent=99 // pred_check_branch
          %2060 = sbr.rel (%p2058) target = $region104
        $region103: #{tpu_custom_call.1} parent=99 // pred_region
          %s2061 = sand.u32 %s319, 1
          %s2062 = scalar_lea.sflag [#allocation4], %s2061
          %s2063 = sand.u32 %s319, 1
          %s2064 = smul.addr %s2063, 8
          %s2065 = scalar_lea.vmem [#allocation11], %s2064
          %2066 = dma.done %s2062, 128
        $region104: #{tpu_custom_call.1} parent=99 // pred_fallthru
          _
      $region100: #{tpu_custom_call.1} parent=5 // pred_fallthru
        _
    $region6: #{tpu_custom_call.1} parent=1 // loop_footer
      %s31 = sadd.s32 1, %s27
    $region7: #{tpu_custom_call.1} parent=1 // loop_footer_branch
      %26 = sbr.rel target = $region3
    $region8: #{tpu_custom_call.1} parent=1 // loop_exit
      _
    %2067 = vsyncpa [#allocation3], 1
    %s2068 = scalar_lea.sflag [#allocation3], 1
    %2069 = vsyncpa %s2068, 1
    %2070 = vsyncpa [#allocation6], 1
    %2071 = vsyncpa [#allocation9], 1
    %2072 = vsyncpa [#allocation4], 1
    %s2073 = scalar_lea.sflag [#allocation4], 1
    %2074 = vsyncpa %s2073, 1

</llo_original>
